<compile_context>
chip_gen: v7x
topology: tpu7x:2x2x1
jax: 0.10.0
libtpu: 0.0.40
codegen_flags: <defaults>
</compile_context>

<pallas_src>
import jax
import jax.numpy as jnp
from jax import lax
from jax.experimental import pallas as pl
from jax.experimental.pallas import tpu as pltpu

BF16 = jnp.bfloat16
F32 = jnp.float32

C1, C2, NH = 16, 32, 10          # conv1 / conv2 out channels, MLP hidden width


# ------------------------------- fused kernel --------------------------------
def _cnn_head_kernel(x_ref, w1_ref, w2_ref, wflat_ref, pk_ref, o_ref,
                     cat1_ref, cat2_ref):
    B, L, D = x_ref.shape
    L1, L2 = L // 2, L // 4
    K = L2 * NH                                        # 370

    # ---- small-parameter pack: static slices, biases already (1, N) f32 ------
    lin2_w = pk_ref[0:NH, 0:NH].astype(BF16)
    lin3_w = pk_ref[16:16 + NH, 0:NH].astype(BF16)
    lin4_w = pk_ref[32:32 + NH, 0:1].astype(BF16)
    b_c1 = pk_ref[48:49, 0:C1]
    b_c2 = pk_ref[49:50, 0:C2]
    b_l1 = pk_ref[50:51, 0:NH]
    b_l2 = pk_ref[51:52, 0:NH]
    b_l3 = pk_ref[52:53, 0:NH]
    b_l4 = pk_ref[53:54, 0:1]

    # ---- stage 1: conv1(k=3, pad=1) + ReLU + MaxPool(2) -----------------------
    # cat1 row (b*L + l) = [x[l-1] | x[l] | x[l+1]].  Only the two padding
    # boundary cells per batch are zeroed; every other cell is overwritten.
    for b in range(B):
        r = b * L
        cat1_ref[r:r + 1, 0:D] = jnp.zeros((1, D), F32)              # pad x[-1]
        cat1_ref[r + L - 1:r + L, 2 * D:3 * D] = jnp.zeros((1, D), F32)  # pad x[L]
        cat1_ref[r + 1:r + L, 0:D] = x_ref[b, 0:L - 1, :].astype(F32)
        cat1_ref[r:r + L, D:2 * D] = x_ref[b, :, :].astype(F32)
        cat1_ref[r:r + L - 1, 2 * D:3 * D] = x_ref[b, 1:L, :].astype(F32)

    # MaxPool folded via even/odd rows (relu/max commute); f32 scratch ->
    # stride-2 sublane reads stay clean strided vld's.
    e1 = cat1_ref[pl.ds(0, B * L1, 2), :].astype(BF16)
    o1 = cat1_ref[pl.ds(1, B * L1, 2), :].astype(BF16)
    h1e = jnp.dot(e1, w1_ref[...], preferred_element_type=F32) + b_c1
    h1o = jnp.dot(o1, w1_ref[...], preferred_element_type=F32) + b_c1
    p1 = jnp.maximum(jnp.maximum(h1e, h1o), 0.0)        # (B*L1, C1) f32

    # ---- stage 2: same structure on the pooled features -----------------------
    for b in range(B):
        r = b * L1
        cat2_ref[r:r + 1, 0:C1] = jnp.zeros((1, C1), F32)
        cat2_ref[r + L1 - 1:r + L1, 2 * C1:3 * C1] = jnp.zeros((1, C1), F32)
        cat2_ref[r + 1:r + L1, 0:C1] = p1[r:r + L1 - 1, :]
        cat2_ref[r:r + L1, C1:2 * C1] = p1[r:r + L1, :]
        cat2_ref[r:r + L1 - 1, 2 * C1:3 * C1] = p1[r + 1:r + L1, :]

    e2 = cat2_ref[pl.ds(0, B * L2, 2), :].astype(BF16)
    o2 = cat2_ref[pl.ds(1, B * L2, 2), :].astype(BF16)
    h2e = jnp.dot(e2, w2_ref[...], preferred_element_type=F32) + b_c2
    h2o = jnp.dot(o2, w2_ref[...], preferred_element_type=F32) + b_c2
    p2 = jnp.maximum(jnp.maximum(h2e, h2o), 0.0).astype(BF16)   # (B*L2, C2)

    # ---- flatten + linear1 fused as a masked matmul (no per-row stores) -------
    # wflat[c, l*NH + j] = W1_torch[j, c*L2 + l];  tsel[j, k] = (k % NH == j).
    wflat = wflat_ref[0:C2, :]                       # (C2, K)  bf16
    tsel = wflat_ref[C2:C2 + NH, :]                  # (NH, K)  bf16 0/1
    G = jnp.dot(p2, wflat, preferred_element_type=F32)           # (B*L2, K)

    r_i = lax.broadcasted_iota(jnp.int32, (B * L2, K), 0)
    k_i = lax.broadcasted_iota(jnp.int32, (B * L2, K), 1)
    rmod = r_i                                        # r % L2 without div/mod
    for _ in range(B - 1):
        rmod = jnp.where(rmod >= L2, rmod - L2, rmod)
    keep = (k_i >= NH * rmod) & (k_i < NH * rmod + NH)            # k//NH == r%L2
    Gm = jnp.where(keep, G, 0.0).astype(BF16)

    # per-batch row sum via a 0/1 indicator matmul (MXU is otherwise idle)
    b_i = lax.broadcasted_iota(jnp.int32, (B, B * L2), 0)
    rr_i = lax.broadcasted_iota(jnp.int32, (B, B * L2), 1)
    ind = ((rr_i >= L2 * b_i) & (rr_i < L2 * (b_i + 1))).astype(BF16)
    S = jnp.dot(ind, Gm, preferred_element_type=F32).astype(BF16)  # (B, K)

    # group-sum over positions: z1_pre = S @ tsel^T   -> linear1 pre-activation
    z1 = lax.dot_general(S, tsel, (((1,), (1,)), ((), ())),
                         preferred_element_type=F32) + b_l1        # (B, NH)
    z1 = jnp.maximum(z1, 0.0).astype(BF16)

    # ---- remaining MLP layers (batch stacked in M) ----------------------------
    z2 = jnp.maximum(jnp.dot(z1, lin2_w, preferred_element_type=F32) + b_l2,
                     0.0).astype(BF16)
    z3 = jnp.maximum(jnp.dot(z2, lin3_w, preferred_element_type=F32) + b_l3,
                     0.0).astype(BF16)
    z4 = jnp.dot(z3, lin4_w, preferred_element_type=F32) + b_l4    # (B, 1) f32

    o_ref[...] = pl.reciprocal(1.0 + jnp.exp(-z4), approx=True).astype(o_ref.dtype)


# --------------------------------- wrapper ------------------------------------
def cnn_head_forward(x, kp):
    B, one, L, D = x.shape
    assert one == 1 and L % 4 == 0
    x_nlc = x.reshape(B, L, D).astype(BF16)           # squeeze(1); NLC layout

    # Gridless single call: the whole model fits trivially in VMEM at this size.
    # For large B, add a leading batch grid axis with dimension_semantics
    # ("parallel",) so v7x's two TensorCores split the batch.
    return pl.pallas_call(
        _cnn_head_kernel,
        out_shape=jax.ShapeDtypeStruct((B, 1), BF16),
        scratch_shapes=[
            pltpu.VMEM((B * L, 3 * D), F32),          # conv1 tap-concat scratch
            pltpu.VMEM((B * (L // 2), 3 * C1), F32),  # conv2 tap-concat scratch
        ],
    )(x_nlc, kp["conv1_w"], kp["conv2_w"], kp["wflat"], kp["pack"])


# ------------------------------ parameter setup --------------------------------
def make_torch_params(key, D=32, lp=37):
    """PyTorch-convention parameters (used directly by the reference)."""
    ks = jax.random.split(key, 12)

    def init(k, shape, scale):
        return (scale * jax.random.normal(k, shape, dtype=F32)).astype(BF16)

    return dict(
        conv1_w=init(ks[0], (C1, D, 3), 0.05), conv1_b=init(ks[1], (C1,), 0.05),
        conv2_w=init(ks[2], (C2, C1, 3), 0.05), conv2_b=init(ks[3], (C2,), 0.05),
        lin1_w=init(ks[4], (NH, C2 * lp), 0.02), lin1_b=init(ks[5], (NH,), 0.02),
        lin2_w=init(ks[6], (NH, NH), 0.1), lin2_b=init(ks[7], (NH,), 0.1),
        lin3_w=init(ks[8], (NH, NH), 0.1), lin3_b=init(ks[9], (NH,), 0.1),
        lin4_w=init(ks[10], (1, NH), 0.1), lin4_b=init(ks[11], (1,), 0.1),
    )


def pack_params(tp, D=32, lp=37):
    """Rearrange torch-convention params into the 5 kernel inputs."""
    K = lp * NH
    # conv weights (out, in, k) -> (3*in, out): row k*in + c multiplies x[l-1+k][c]
    w1 = jnp.transpose(tp["conv1_w"].astype(F32), (2, 1, 0)).reshape(3 * D, C1).astype(BF16)
    w2 = jnp.transpose(tp["conv2_w"].astype(F32), (2, 1, 0)).reshape(3 * C1, C2).astype(BF16)

    # linear1 (torch flatten index c*lp + l) -> wflat[c, l*NH + j]
    wflat = jnp.transpose(tp["lin1_w"].astype(F32).reshape(NH, C2, lp),
                          (1, 2, 0)).reshape(C2, K)
    tsel = (jnp.arange(K)[None, :] % NH == jnp.arange(NH)[:, None]).astype(F32)
    wflat_ext = jnp.concatenate([wflat, tsel, jnp.zeros((6, K), F32)],
                                axis=0).astype(BF16)               # (48, K)

    # everything smaller than one (8,128) tile goes into a single f32 pack
    pk = jnp.zeros((56, 128), F32)
    pk = pk.at[0:NH, 0:NH].set(tp["lin2_w"].astype(F32).T)
    pk = pk.at[16:16 + NH, 0:NH].set(tp["lin3_w"].astype(F32).T)
    pk = pk.at[32:32 + NH, 0:1].set(tp["lin4_w"].astype(F32).T)
    pk = pk.at[48, 0:C1].set(tp["conv1_b"].astype(F32))
    pk = pk.at[49, 0:C2].set(tp["conv2_b"].astype(F32))
    pk = pk.at[50, 0:NH].set(tp["lin1_b"].astype(F32))
    pk = pk.at[51, 0:NH].set(tp["lin2_b"].astype(F32))
    pk = pk.at[52, 0:NH].set(tp["lin3_b"].astype(F32))
    pk = pk.at[53, 0:1].set(tp["lin4_b"].astype(F32))

    return dict(conv1_w=w1, conv2_w=w2, wflat=wflat_ext, pack=pk)


# ----------------------------- pure-JAX reference ------------------------------
def reference_forward(x, tp):
    B, _, L, D = x.shape
    h = x.reshape(B, L, D).astype(F32)

    def conv_relu_pool(h, w, b):
        Lh, Cout = h.shape[1], w.shape[0]
        hp = jnp.pad(h, ((0, 0), (1, 1), (0, 0)))
        wf = w.astype(F32)
        y = (jnp.einsum('blc,oc->blo', hp[:, 0:Lh], wf[:, :, 0]) +
             jnp.einsum('blc,oc->blo', hp[:, 1:Lh + 1], wf[:, :, 1]) +
             jnp.einsum('blc,oc->blo', hp[:, 2:Lh + 2], wf[:, :, 2]) +
             b.astype(F32))
        y = jnp.maximum(y, 0.0)
        return jnp.max(y.reshape(B, Lh // 2, 2, Cout), axis=2)

    h = conv_relu_pool(h, tp["conv1_w"], tp["conv1_b"])
    h = conv_relu_pool(h, tp["conv2_w"], tp["conv2_b"])
    f = jnp.transpose(h, (0, 2, 1)).reshape(B, -1)     # torch channel-major flatten

    def dense(z, w, b):
        return z @ w.astype(F32).T + b.astype(F32)

    z = jnp.maximum(dense(f, tp["lin1_w"], tp["lin1_b"]), 0.0)
    z = jnp.maximum(dense(z, tp["lin2_w"], tp["lin2_b"]), 0.0)
    z = jnp.maximum(dense(z, tp["lin3_w"], tp["lin3_b"]), 0.0)
    z = dense(z, tp["lin4_w"], tp["lin4_b"])
    return 1.0 / (1.0 + jnp.exp(-z))


if __name__ == "__main__":
    key = jax.random.PRNGKey(0)
    kx, kp = jax.random.split(key)

    # L = 148 is implied by linear1.in_features = 1184 = 32 * (L // 4).
    B, D, L = 2, 32, 148
    x = jax.random.normal(kx, (B, 1, L, D), dtype=F32).astype(BF16)
    tp = make_torch_params(kp, D=D, lp=L // 4)
    kparams = pack_params(tp, D=D, lp=L // 4)

    out = jax.block_until_ready(cnn_head_forward(x, kparams))
    assert out.shape == (B, 1) and out.dtype == BF16

    ref = reference_forward(x, tp)
    assert jnp.allclose(out.astype(F32), ref.astype(F32), atol=0.06), (out, ref)

    print("KERNEL_OK")
</pallas_src>

<mosaic_0001>
module attributes {stable_mosaic.version = 11 : i64} {
  func.func @_cnn_head_kernel(%arg0: memref<2x148x32xbf16, #tpu.memory_space<vmem>>, %arg1: memref<96x16xbf16, #tpu.memory_space<vmem>>, %arg2: memref<48x32xbf16, #tpu.memory_space<vmem>>, %arg3: memref<48x370xbf16, #tpu.memory_space<vmem>>, %arg4: memref<56x128xf32, #tpu.memory_space<vmem>>, %arg5: memref<2x1xbf16, #tpu.memory_space<vmem>>, %arg6: memref<296x96xf32, #tpu.memory_space<vmem>>, %arg7: memref<148x48xf32, #tpu.memory_space<vmem>>) attributes {dimension_semantics = [], scalar_prefetch = 0 : i64, scratch_operands = 2 : i64, tpu.core_type = #tpu.core_type<tc>} {
    %c0 = arith.constant 0 : index
    %c0_0 = arith.constant 0 : index
    %0 = vector.load %arg4[%c0, %c0_0] : memref<56x128xf32, #tpu.memory_space<vmem>>, vector<10x10xf32>
    %1 = arith.truncf %0 : vector<10x10xf32> to vector<10x10xbf16>
    %c16 = arith.constant 16 : index
    %c0_1 = arith.constant 0 : index
    %2 = vector.load %arg4[%c16, %c0_1] : memref<56x128xf32, #tpu.memory_space<vmem>>, vector<10x10xf32>
    %3 = arith.truncf %2 : vector<10x10xf32> to vector<10x10xbf16>
    %c32 = arith.constant 32 : index
    %c0_2 = arith.constant 0 : index
    %4 = vector.load %arg4[%c32, %c0_2] : memref<56x128xf32, #tpu.memory_space<vmem>>, vector<10x1xf32>
    %5 = arith.truncf %4 : vector<10x1xf32> to vector<10x1xbf16>
    %c48 = arith.constant 48 : index
    %c0_3 = arith.constant 0 : index
    %6 = vector.load %arg4[%c48, %c0_3] : memref<56x128xf32, #tpu.memory_space<vmem>>, vector<1x16xf32>
    %c49 = arith.constant 49 : index
    %c0_4 = arith.constant 0 : index
    %7 = vector.load %arg4[%c49, %c0_4] : memref<56x128xf32, #tpu.memory_space<vmem>>, vector<1x32xf32>
    %c50 = arith.constant 50 : index
    %c0_5 = arith.constant 0 : index
    %8 = vector.load %arg4[%c50, %c0_5] : memref<56x128xf32, #tpu.memory_space<vmem>>, vector<1x10xf32>
    %c51 = arith.constant 51 : index
    %c0_6 = arith.constant 0 : index
    %9 = vector.load %arg4[%c51, %c0_6] : memref<56x128xf32, #tpu.memory_space<vmem>>, vector<1x10xf32>
    %c52 = arith.constant 52 : index
    %c0_7 = arith.constant 0 : index
    %10 = vector.load %arg4[%c52, %c0_7] : memref<56x128xf32, #tpu.memory_space<vmem>>, vector<1x10xf32>
    %c53 = arith.constant 53 : index
    %c0_8 = arith.constant 0 : index
    %11 = vector.load %arg4[%c53, %c0_8] : memref<56x128xf32, #tpu.memory_space<vmem>>, vector<1x1xf32>
    %cst = arith.constant 0.000000e+00 : f32
    %12 = vector.broadcast %cst : f32 to vector<1x32xf32>
    %c0_9 = arith.constant 0 : index
    %c0_10 = arith.constant 0 : index
    %13 = vector.load %arg6[%c0_9, %c0_10] : memref<296x96xf32, #tpu.memory_space<vmem>>, vector<1x32xf32>
    tpu.vector_store %arg6[%c0_9, %c0_10], %12 {strides = array<i32>} : memref<296x96xf32, #tpu.memory_space<vmem>>, vector<1x32xf32>,
    %cst_11 = arith.constant 0.000000e+00 : f32
    %14 = vector.broadcast %cst_11 : f32 to vector<1x32xf32>
    %c147 = arith.constant 147 : index
    %c64 = arith.constant 64 : index
    %15 = vector.load %arg6[%c147, %c64] : memref<296x96xf32, #tpu.memory_space<vmem>>, vector<1x32xf32>
    tpu.vector_store %arg6[%c147, %c64], %14 {strides = array<i32>} : memref<296x96xf32, #tpu.memory_space<vmem>>, vector<1x32xf32>,
    %c0_12 = arith.constant 0 : index
    %c0_13 = arith.constant 0 : index
    %c0_14 = arith.constant 0 : index
    %16 = vector.load %arg0[%c0_12, %c0_13, %c0_14] : memref<2x148x32xbf16, #tpu.memory_space<vmem>>, vector<1x147x32xbf16>
    %17 = vector.shape_cast %16 : vector<1x147x32xbf16> to vector<147x32xbf16>
    %18 = arith.extf %17 : vector<147x32xbf16> to vector<147x32xf32>
    %c1 = arith.constant 1 : index
    %c0_15 = arith.constant 0 : index
    %19 = vector.load %arg6[%c1, %c0_15] : memref<296x96xf32, #tpu.memory_space<vmem>>, vector<147x32xf32>
    tpu.vector_store %arg6[%c1, %c0_15], %18 {strides = array<i32>} : memref<296x96xf32, #tpu.memory_space<vmem>>, vector<147x32xf32>,
    %c0_16 = arith.constant 0 : index
    %c0_17 = arith.constant 0 : index
    %c0_18 = arith.constant 0 : index
    %20 = vector.load %arg0[%c0_16, %c0_17, %c0_18] : memref<2x148x32xbf16, #tpu.memory_space<vmem>>, vector<1x148x32xbf16>
    %21 = vector.shape_cast %20 : vector<1x148x32xbf16> to vector<148x32xbf16>
    %22 = arith.extf %21 : vector<148x32xbf16> to vector<148x32xf32>
    %c0_19 = arith.constant 0 : index
    %c32_20 = arith.constant 32 : index
    %23 = vector.load %arg6[%c0_19, %c32_20] : memref<296x96xf32, #tpu.memory_space<vmem>>, vector<148x32xf32>
    tpu.vector_store %arg6[%c0_19, %c32_20], %22 {strides = array<i32>} : memref<296x96xf32, #tpu.memory_space<vmem>>, vector<148x32xf32>,
    %c0_21 = arith.constant 0 : index
    %c1_22 = arith.constant 1 : index
    %c0_23 = arith.constant 0 : index
    %24 = vector.load %arg0[%c0_21, %c1_22, %c0_23] : memref<2x148x32xbf16, #tpu.memory_space<vmem>>, vector<1x147x32xbf16>
    %25 = vector.shape_cast %24 : vector<1x147x32xbf16> to vector<147x32xbf16>
    %26 = arith.extf %25 : vector<147x32xbf16> to vector<147x32xf32>
    %c0_24 = arith.constant 0 : index
    %c64_25 = arith.constant 64 : index
    %27 = vector.load %arg6[%c0_24, %c64_25] : memref<296x96xf32, #tpu.memory_space<vmem>>, vector<147x32xf32>
    tpu.vector_store %arg6[%c0_24, %c64_25], %26 {strides = array<i32>} : memref<296x96xf32, #tpu.memory_space<vmem>>, vector<147x32xf32>,
    %cst_26 = arith.constant 0.000000e+00 : f32
    %28 = vector.broadcast %cst_26 : f32 to vector<1x32xf32>
    %c148 = arith.constant 148 : index
    %c0_27 = arith.constant 0 : index
    %29 = vector.load %arg6[%c148, %c0_27] : memref<296x96xf32, #tpu.memory_space<vmem>>, vector<1x32xf32>
    tpu.vector_store %arg6[%c148, %c0_27], %28 {strides = array<i32>} : memref<296x96xf32, #tpu.memory_space<vmem>>, vector<1x32xf32>,
    %cst_28 = arith.constant 0.000000e+00 : f32
    %30 = vector.broadcast %cst_28 : f32 to vector<1x32xf32>
    %c295 = arith.constant 295 : index
    %c64_29 = arith.constant 64 : index
    %31 = vector.load %arg6[%c295, %c64_29] : memref<296x96xf32, #tpu.memory_space<vmem>>, vector<1x32xf32>
    tpu.vector_store %arg6[%c295, %c64_29], %30 {strides = array<i32>} : memref<296x96xf32, #tpu.memory_space<vmem>>, vector<1x32xf32>,
    %c1_30 = arith.constant 1 : index
    %c0_31 = arith.constant 0 : index
    %c0_32 = arith.constant 0 : index
    %32 = vector.load %arg0[%c1_30, %c0_31, %c0_32] : memref<2x148x32xbf16, #tpu.memory_space<vmem>>, vector<1x147x32xbf16>
    %33 = vector.shape_cast %32 : vector<1x147x32xbf16> to vector<147x32xbf16>
    %34 = arith.extf %33 : vector<147x32xbf16> to vector<147x32xf32>
    %c149 = arith.constant 149 : index
    %c0_33 = arith.constant 0 : index
    %35 = vector.load %arg6[%c149, %c0_33] : memref<296x96xf32, #tpu.memory_space<vmem>>, vector<147x32xf32>
    tpu.vector_store %arg6[%c149, %c0_33], %34 {strides = array<i32>} : memref<296x96xf32, #tpu.memory_space<vmem>>, vector<147x32xf32>,
    %c1_34 = arith.constant 1 : index
    %c0_35 = arith.constant 0 : index
    %c0_36 = arith.constant 0 : index
    %36 = vector.load %arg0[%c1_34, %c0_35, %c0_36] : memref<2x148x32xbf16, #tpu.memory_space<vmem>>, vector<1x148x32xbf16>
    %37 = vector.shape_cast %36 : vector<1x148x32xbf16> to vector<148x32xbf16>
    %38 = arith.extf %37 : vector<148x32xbf16> to vector<148x32xf32>
    %c148_37 = arith.constant 148 : index
    %c32_38 = arith.constant 32 : index
    %39 = vector.load %arg6[%c148_37, %c32_38] : memref<296x96xf32, #tpu.memory_space<vmem>>, vector<148x32xf32>
    tpu.vector_store %arg6[%c148_37, %c32_38], %38 {strides = array<i32>} : memref<296x96xf32, #tpu.memory_space<vmem>>, vector<148x32xf32>,
    %c1_39 = arith.constant 1 : index
    %c1_40 = arith.constant 1 : index
    %c0_41 = arith.constant 0 : index
    %40 = vector.load %arg0[%c1_39, %c1_40, %c0_41] : memref<2x148x32xbf16, #tpu.memory_space<vmem>>, vector<1x147x32xbf16>
    %41 = vector.shape_cast %40 : vector<1x147x32xbf16> to vector<147x32xbf16>
    %42 = arith.extf %41 : vector<147x32xbf16> to vector<147x32xf32>
    %c148_42 = arith.constant 148 : index
    %c64_43 = arith.constant 64 : index
    %43 = vector.load %arg6[%c148_42, %c64_43] : memref<296x96xf32, #tpu.memory_space<vmem>>, vector<147x32xf32>
    tpu.vector_store %arg6[%c148_42, %c64_43], %42 {strides = array<i32>} : memref<296x96xf32, #tpu.memory_space<vmem>>, vector<147x32xf32>,
    %c0_44 = arith.constant 0 : index
    %c0_45 = arith.constant 0 : index
    %44 = tpu.strided_load %arg6[%c0_44, %c0_45] {strides = array<i32: 2, 1>} : memref<296x96xf32, #tpu.memory_space<vmem>>, vector<148x96xf32>
    %45 = arith.truncf %44 : vector<148x96xf32> to vector<148x96xbf16>
    %c1_46 = arith.constant 1 : index
    %c0_47 = arith.constant 0 : index
    %46 = tpu.strided_load %arg6[%c1_46, %c0_47] {strides = array<i32: 2, 1>} : memref<296x96xf32, #tpu.memory_space<vmem>>, vector<148x96xf32>
    %47 = arith.truncf %46 : vector<148x96xf32> to vector<148x96xbf16>
    %c0_48 = arith.constant 0 : index
    %c0_49 = arith.constant 0 : index
    %48 = vector.load %arg1[%c0_48, %c0_49] : memref<96x16xbf16, #tpu.memory_space<vmem>>, vector<96x16xbf16>
    %cst_50 = arith.constant dense<0.000000e+00> : vector<148x16xf32>
    %49 = tpu.matmul %45, %48, %cst_50 {dimension_numbers = #tpu.dot_dimension_numbers<[1], [0], [0], [1], [0, 0, 1, 1], [], []>} : vector<148x96xbf16>, vector<96x16xbf16>, vector<148x16xf32> -> vector<148x16xf32>
    %50 = vector.broadcast %6 : vector<1x16xf32> to vector<148x16xf32>
    %51 = arith.addf %49, %50 : vector<148x16xf32>
    %c0_51 = arith.constant 0 : index
    %c0_52 = arith.constant 0 : index
    %52 = vector.load %arg1[%c0_51, %c0_52] : memref<96x16xbf16, #tpu.memory_space<vmem>>, vector<96x16xbf16>
    %cst_53 = arith.constant dense<0.000000e+00> : vector<148x16xf32>
    %53 = tpu.matmul %47, %52, %cst_53 {dimension_numbers = #tpu.dot_dimension_numbers<[1], [0], [0], [1], [0, 0, 1, 1], [], []>} : vector<148x96xbf16>, vector<96x16xbf16>, vector<148x16xf32> -> vector<148x16xf32>
    %54 = vector.broadcast %6 : vector<1x16xf32> to vector<148x16xf32>
    %55 = arith.addf %53, %54 : vector<148x16xf32>
    %56 = arith.maximumf %51, %55 : vector<148x16xf32>
    %cst_54 = arith.constant 0.000000e+00 : f32
    %57 = vector.broadcast %cst_54 : f32 to vector<148x16xf32>
    %58 = arith.maximumf %56, %57 : vector<148x16xf32>
    %cst_55 = arith.constant 0.000000e+00 : f32
    %59 = vector.broadcast %cst_55 : f32 to vector<1x16xf32>
    %c0_56 = arith.constant 0 : index
    %c0_57 = arith.constant 0 : index
    %60 = vector.load %arg7[%c0_56, %c0_57] : memref<148x48xf32, #tpu.memory_space<vmem>>, vector<1x16xf32>
    tpu.vector_store %arg7[%c0_56, %c0_57], %59 {strides = array<i32>} : memref<148x48xf32, #tpu.memory_space<vmem>>, vector<1x16xf32>,
    %cst_58 = arith.constant 0.000000e+00 : f32
    %61 = vector.broadcast %cst_58 : f32 to vector<1x16xf32>
    %c73 = arith.constant 73 : index
    %c32_59 = arith.constant 32 : index
    %62 = vector.load %arg7[%c73, %c32_59] : memref<148x48xf32, #tpu.memory_space<vmem>>, vector<1x16xf32>
    tpu.vector_store %arg7[%c73, %c32_59], %61 {strides = array<i32>} : memref<148x48xf32, #tpu.memory_space<vmem>>, vector<1x16xf32>,
    %63 = vector.extract_strided_slice %58 {offsets = [0, 0], sizes = [73, 16], strides = [1, 1]} : vector<148x16xf32> to vector<73x16xf32>
    %c1_60 = arith.constant 1 : index
    %c0_61 = arith.constant 0 : index
    %64 = vector.load %arg7[%c1_60, %c0_61] : memref<148x48xf32, #tpu.memory_space<vmem>>, vector<73x16xf32>
    tpu.vector_store %arg7[%c1_60, %c0_61], %63 {strides = array<i32>} : memref<148x48xf32, #tpu.memory_space<vmem>>, vector<73x16xf32>,
    %65 = vector.extract_strided_slice %58 {offsets = [0, 0], sizes = [74, 16], strides = [1, 1]} : vector<148x16xf32> to vector<74x16xf32>
    %c0_62 = arith.constant 0 : index
    %c16_63 = arith.constant 16 : index
    %66 = vector.load %arg7[%c0_62, %c16_63] : memref<148x48xf32, #tpu.memory_space<vmem>>, vector<74x16xf32>
    tpu.vector_store %arg7[%c0_62, %c16_63], %65 {strides = array<i32>} : memref<148x48xf32, #tpu.memory_space<vmem>>, vector<74x16xf32>,
    %67 = vector.extract_strided_slice %58 {offsets = [1, 0], sizes = [73, 16], strides = [1, 1]} : vector<148x16xf32> to vector<73x16xf32>
    %c0_64 = arith.constant 0 : index
    %c32_65 = arith.constant 32 : index
    %68 = vector.load %arg7[%c0_64, %c32_65] : memref<148x48xf32, #tpu.memory_space<vmem>>, vector<73x16xf32>
    tpu.vector_store %arg7[%c0_64, %c32_65], %67 {strides = array<i32>} : memref<148x48xf32, #tpu.memory_space<vmem>>, vector<73x16xf32>,
    %cst_66 = arith.constant 0.000000e+00 : f32
    %69 = vector.broadcast %cst_66 : f32 to vector<1x16xf32>
    %c74 = arith.constant 74 : index
    %c0_67 = arith.constant 0 : index
    %70 = vector.load %arg7[%c74, %c0_67] : memref<148x48xf32, #tpu.memory_space<vmem>>, vector<1x16xf32>
    tpu.vector_store %arg7[%c74, %c0_67], %69 {strides = array<i32>} : memref<148x48xf32, #tpu.memory_space<vmem>>, vector<1x16xf32>,
    %cst_68 = arith.constant 0.000000e+00 : f32
    %71 = vector.broadcast %cst_68 : f32 to vector<1x16xf32>
    %c147_69 = arith.constant 147 : index
    %c32_70 = arith.constant 32 : index
    %72 = vector.load %arg7[%c147_69, %c32_70] : memref<148x48xf32, #tpu.memory_space<vmem>>, vector<1x16xf32>
    tpu.vector_store %arg7[%c147_69, %c32_70], %71 {strides = array<i32>} : memref<148x48xf32, #tpu.memory_space<vmem>>, vector<1x16xf32>,
    %73 = vector.extract_strided_slice %58 {offsets = [74, 0], sizes = [73, 16], strides = [1, 1]} : vector<148x16xf32> to vector<73x16xf32>
    %c75 = arith.constant 75 : index
    %c0_71 = arith.constant 0 : index
    %74 = vector.load %arg7[%c75, %c0_71] : memref<148x48xf32, #tpu.memory_space<vmem>>, vector<73x16xf32>
    tpu.vector_store %arg7[%c75, %c0_71], %73 {strides = array<i32>} : memref<148x48xf32, #tpu.memory_space<vmem>>, vector<73x16xf32>,
    %75 = vector.extract_strided_slice %58 {offsets = [74, 0], sizes = [74, 16], strides = [1, 1]} : vector<148x16xf32> to vector<74x16xf32>
    %c74_72 = arith.constant 74 : index
    %c16_73 = arith.constant 16 : index
    %76 = vector.load %arg7[%c74_72, %c16_73] : memref<148x48xf32, #tpu.memory_space<vmem>>, vector<74x16xf32>
    tpu.vector_store %arg7[%c74_72, %c16_73], %75 {strides = array<i32>} : memref<148x48xf32, #tpu.memory_space<vmem>>, vector<74x16xf32>,
    %77 = vector.extract_strided_slice %58 {offsets = [75, 0], sizes = [73, 16], strides = [1, 1]} : vector<148x16xf32> to vector<73x16xf32>
    %c74_74 = arith.constant 74 : index
    %c32_75 = arith.constant 32 : index
    %78 = vector.load %arg7[%c74_74, %c32_75] : memref<148x48xf32, #tpu.memory_space<vmem>>, vector<73x16xf32>
    tpu.vector_store %arg7[%c74_74, %c32_75], %77 {strides = array<i32>} : memref<148x48xf32, #tpu.memory_space<vmem>>, vector<73x16xf32>,
    %c0_76 = arith.constant 0 : index
    %c0_77 = arith.constant 0 : index
    %79 = tpu.strided_load %arg7[%c0_76, %c0_77] {strides = array<i32: 2, 1>} : memref<148x48xf32, #tpu.memory_space<vmem>>, vector<74x48xf32>
    %80 = arith.truncf %79 : vector<74x48xf32> to vector<74x48xbf16>
    %c1_78 = arith.constant 1 : index
    %c0_79 = arith.constant 0 : index
    %81 = tpu.strided_load %arg7[%c1_78, %c0_79] {strides = array<i32: 2, 1>} : memref<148x48xf32, #tpu.memory_space<vmem>>, vector<74x48xf32>
    %82 = arith.truncf %81 : vector<74x48xf32> to vector<74x48xbf16>
    %c0_80 = arith.constant 0 : index
    %c0_81 = arith.constant 0 : index
    %83 = vector.load %arg2[%c0_80, %c0_81] : memref<48x32xbf16, #tpu.memory_space<vmem>>, vector<48x32xbf16>
    %cst_82 = arith.constant dense<0.000000e+00> : vector<74x32xf32>
    %84 = tpu.matmul %80, %83, %cst_82 {dimension_numbers = #tpu.dot_dimension_numbers<[1], [0], [0], [1], [0, 0, 1, 1], [], []>} : vector<74x48xbf16>, vector<48x32xbf16>, vector<74x32xf32> -> vector<74x32xf32>
    %85 = vector.broadcast %7 : vector<1x32xf32> to vector<74x32xf32>
    %86 = arith.addf %84, %85 : vector<74x32xf32>
    %c0_83 = arith.constant 0 : index
    %c0_84 = arith.constant 0 : index
    %87 = vector.load %arg2[%c0_83, %c0_84] : memref<48x32xbf16, #tpu.memory_space<vmem>>, vector<48x32xbf16>
    %cst_85 = arith.constant dense<0.000000e+00> : vector<74x32xf32>
    %88 = tpu.matmul %82, %87, %cst_85 {dimension_numbers = #tpu.dot_dimension_numbers<[1], [0], [0], [1], [0, 0, 1, 1], [], []>} : vector<74x48xbf16>, vector<48x32xbf16>, vector<74x32xf32> -> vector<74x32xf32>
    %89 = vector.broadcast %7 : vector<1x32xf32> to vector<74x32xf32>
    %90 = arith.addf %88, %89 : vector<74x32xf32>
    %91 = arith.maximumf %86, %90 : vector<74x32xf32>
    %cst_86 = arith.constant 0.000000e+00 : f32
    %92 = vector.broadcast %cst_86 : f32 to vector<74x32xf32>
    %93 = arith.maximumf %91, %92 : vector<74x32xf32>
    %94 = arith.truncf %93 : vector<74x32xf32> to vector<74x32xbf16>
    %c0_87 = arith.constant 0 : index
    %c0_88 = arith.constant 0 : index
    %95 = vector.load %arg3[%c0_87, %c0_88] : memref<48x370xbf16, #tpu.memory_space<vmem>>, vector<32x370xbf16>
    %c32_89 = arith.constant 32 : index
    %c0_90 = arith.constant 0 : index
    %96 = vector.load %arg3[%c32_89, %c0_90] : memref<48x370xbf16, #tpu.memory_space<vmem>>, vector<10x370xbf16>
    %cst_91 = arith.constant dense<0.000000e+00> : vector<74x370xf32>
    %97 = tpu.matmul %94, %95, %cst_91 {dimension_numbers = #tpu.dot_dimension_numbers<[1], [0], [0], [1], [0, 0, 1, 1], [], []>} : vector<74x32xbf16>, vector<32x370xbf16>, vector<74x370xf32> -> vector<74x370xf32>
    %98 = tpu.iota {dimensions = array<i32: 0>} : vector<74x370xi32>
    %99 = tpu.iota {dimensions = array<i32: 1>} : vector<74x370xi32>
    %c37_i32 = arith.constant 37 : i32
    %100 = vector.broadcast %c37_i32 : i32 to vector<74x370xi32>
    %101 = arith.cmpi sge, %98, %100 : vector<74x370xi32>
    %c37_i32_92 = arith.constant 37 : i32
    %102 = vector.broadcast %c37_i32_92 : i32 to vector<74x370xi32>
    %103 = arith.subi %98, %102 : vector<74x370xi32>
    %104 = arith.select %101, %103, %98 : vector<74x370xi1>, vector<74x370xi32>
    %c10_i32 = arith.constant 10 : i32
    %105 = vector.broadcast %c10_i32 : i32 to vector<74x370xi32>
    %106 = arith.muli %105, %104 : vector<74x370xi32>
    %107 = arith.cmpi sge, %99, %106 : vector<74x370xi32>
    %c10_i32_93 = arith.constant 10 : i32
    %108 = vector.broadcast %c10_i32_93 : i32 to vector<74x370xi32>
    %109 = arith.muli %108, %104 : vector<74x370xi32>
    %c10_i32_94 = arith.constant 10 : i32
    %110 = vector.broadcast %c10_i32_94 : i32 to vector<74x370xi32>
    %111 = arith.addi %109, %110 : vector<74x370xi32>
    %112 = arith.cmpi slt, %99, %111 : vector<74x370xi32>
    %113 = arith.andi %107, %112 : vector<74x370xi1>
    %cst_95 = arith.constant 0.000000e+00 : f32
    %114 = vector.broadcast %cst_95 : f32 to vector<74x370xf32>
    %115 = arith.select %113, %97, %114 : vector<74x370xi1>, vector<74x370xf32>
    %116 = arith.truncf %115 : vector<74x370xf32> to vector<74x370xbf16>
    %117 = tpu.iota {dimensions = array<i32: 0>} : vector<2x74xi32>
    %118 = tpu.iota {dimensions = array<i32: 1>} : vector<2x74xi32>
    %c37_i32_96 = arith.constant 37 : i32
    %119 = vector.broadcast %c37_i32_96 : i32 to vector<2x74xi32>
    %120 = arith.muli %119, %117 : vector<2x74xi32>
    %121 = arith.cmpi sge, %118, %120 : vector<2x74xi32>
    %c1_i32 = arith.constant 1 : i32
    %122 = vector.broadcast %c1_i32 : i32 to vector<2x74xi32>
    %123 = arith.addi %117, %122 : vector<2x74xi32>
    %c37_i32_97 = arith.constant 37 : i32
    %124 = vector.broadcast %c37_i32_97 : i32 to vector<2x74xi32>
    %125 = arith.muli %124, %123 : vector<2x74xi32>
    %126 = arith.cmpi slt, %118, %125 : vector<2x74xi32>
    %127 = arith.andi %121, %126 : vector<2x74xi1>
    %128 = arith.extui %127 : vector<2x74xi1> to vector<2x74xi32>
    %129 = arith.sitofp %128 : vector<2x74xi32> to vector<2x74xf32>
    %130 = arith.truncf %129 : vector<2x74xf32> to vector<2x74xbf16>
    %cst_98 = arith.constant dense<0.000000e+00> : vector<2x370xf32>
    %131 = tpu.matmul %130, %116, %cst_98 {dimension_numbers = #tpu.dot_dimension_numbers<[1], [0], [0], [1], [0, 0, 1, 1], [], []>} : vector<2x74xbf16>, vector<74x370xbf16>, vector<2x370xf32> -> vector<2x370xf32>
    %132 = arith.truncf %131 : vector<2x370xf32> to vector<2x370xbf16>
    %cst_99 = arith.constant dense<0.000000e+00> : vector<2x10xf32>
    %133 = tpu.matmul %132, %96, %cst_99 {dimension_numbers = #tpu.dot_dimension_numbers<[1], [1], [0], [0], [0, 0, 1, 0], [], []>} : vector<2x370xbf16>, vector<10x370xbf16>, vector<2x10xf32> -> vector<2x10xf32>
    %134 = vector.broadcast %8 : vector<1x10xf32> to vector<2x10xf32>
    %135 = arith.addf %133, %134 : vector<2x10xf32>
    %cst_100 = arith.constant 0.000000e+00 : f32
    %136 = vector.broadcast %cst_100 : f32 to vector<2x10xf32>
    %137 = arith.maximumf %135, %136 : vector<2x10xf32>
    %138 = arith.truncf %137 : vector<2x10xf32> to vector<2x10xbf16>
    %cst_101 = arith.constant dense<0.000000e+00> : vector<2x10xf32>
    %139 = tpu.matmul %138, %1, %cst_101 {dimension_numbers = #tpu.dot_dimension_numbers<[1], [0], [0], [1], [0, 0, 1, 1], [], []>} : vector<2x10xbf16>, vector<10x10xbf16>, vector<2x10xf32> -> vector<2x10xf32>
    %140 = vector.broadcast %9 : vector<1x10xf32> to vector<2x10xf32>
    %141 = arith.addf %139, %140 : vector<2x10xf32>
    %cst_102 = arith.constant 0.000000e+00 : f32
    %142 = vector.broadcast %cst_102 : f32 to vector<2x10xf32>
    %143 = arith.maximumf %141, %142 : vector<2x10xf32>
    %144 = arith.truncf %143 : vector<2x10xf32> to vector<2x10xbf16>
    %cst_103 = arith.constant dense<0.000000e+00> : vector<2x10xf32>
    %145 = tpu.matmul %144, %3, %cst_103 {dimension_numbers = #tpu.dot_dimension_numbers<[1], [0], [0], [1], [0, 0, 1, 1], [], []>} : vector<2x10xbf16>, vector<10x10xbf16>, vector<2x10xf32> -> vector<2x10xf32>
    %146 = vector.broadcast %10 : vector<1x10xf32> to vector<2x10xf32>
    %147 = arith.addf %145, %146 : vector<2x10xf32>
    %cst_104 = arith.constant 0.000000e+00 : f32
    %148 = vector.broadcast %cst_104 : f32 to vector<2x10xf32>
    %149 = arith.maximumf %147, %148 : vector<2x10xf32>
    %150 = arith.truncf %149 : vector<2x10xf32> to vector<2x10xbf16>
    %cst_105 = arith.constant dense<0.000000e+00> : vector<2x1xf32>
    %151 = tpu.matmul %150, %5, %cst_105 {dimension_numbers = #tpu.dot_dimension_numbers<[1], [0], [0], [1], [0, 0, 1, 1], [], []>} : vector<2x10xbf16>, vector<10x1xbf16>, vector<2x1xf32> -> vector<2x1xf32>
    %152 = vector.broadcast %11 : vector<1x1xf32> to vector<2x1xf32>
    %153 = arith.addf %151, %152 : vector<2x1xf32>
    %cst_106 = arith.constant 0.000000e+00 : f32
    %154 = vector.broadcast %cst_106 : f32 to vector<2x1xf32>
    %155 = arith.subf %154, %153 : vector<2x1xf32>
    %156 = math.exp %155 : vector<2x1xf32>
    %cst_107 = arith.constant 1.000000e+00 : f32
    %157 = vector.broadcast %cst_107 : f32 to vector<2x1xf32>
    %158 = arith.addf %157, %156 : vector<2x1xf32>
    %159 = tpu.reciprocal %158 {approx = true} : vector<2x1xf32> -> vector<2x1xf32>
    %160 = arith.truncf %159 : vector<2x1xf32> to vector<2x1xbf16>
    %c0_108 = arith.constant 0 : index
    %c0_109 = arith.constant 0 : index
    %161 = vector.load %arg5[%c0_108, %c0_109] : memref<2x1xbf16, #tpu.memory_space<vmem>>, vector<2x1xbf16>
    tpu.vector_store %arg5[%c0_108, %c0_109], %160 {strides = array<i32>} : memref<2x1xbf16, #tpu.memory_space<vmem>>, vector<2x1xbf16>,
    return
  }
}

</mosaic_0001>

<llo_original>
// kernel: tpu_custom_call.1
$region0: #{tpu_custom_call.1}
  #allocation0 [shape = 'u32[]', space=smem, size = 0x4, offset = 0x4, fixed_abs, tag = 'smem constant byte address 0x4 - core index']
  #allocation1 [shape = 'u32[144,128]{1,0:T(1,128)}', space=vmem, size = 0x12000, scoped, tag = 'internal scratch']
  #allocation2 [shape = 'f32[296,96]{1,0:T(8,128)}', space=vmem, size = 0x25000, scoped, tag = 'scratch operand']
  #allocation3 [shape = 'f32[148,48]{1,0:T(8,128)}', space=vmem, size = 0x13000, scoped, tag = 'scratch operand']
  %s0 = inlined_call_operand.vmem [shape: bf16[2,148,32], index: 0, kind: input, shape index: {}]
  %s1 = inlined_call_operand.vmem [shape: bf16[96,16], index: 1, kind: input, shape index: {}]
  %s2 = inlined_call_operand.vmem [shape: bf16[48,32], index: 2, kind: input, shape index: {}]
  %s3 = inlined_call_operand.vmem [shape: bf16[48,370], index: 3, kind: input, shape index: {}]
  %s4 = inlined_call_operand.vmem [shape: f32[56,128], index: 4, kind: input, shape index: {}]
  %s5 = inlined_call_operand.hbm [shape: bf16[2,1], index: 5, kind: output, shape index: {}]
  %s6 = sld [smem:[#allocation0]]
  $region30: #{tpu_custom_call.1} parent=0
    _
  %s8 = ssub.s32 1, %s6
  %s9 = scalar_select 0, %s8, %s6
  $region1: #{tpu_custom_call.1} parent=0
    #allocation4 [shape = 'u8[512]{0}', space=vmem, size = 0x400, scoped, tag = 'output window, operand 0, single buffered']
    #allocation5 [shape = 's32[1]{0}', space=sflag, size = 0x4, scoped, tag = 'scoped memory for tpu_custom_call.1']
    %10 = vsyncpa [#allocation5], 0
    // Predicated region
    $region2: #{tpu_custom_call.1} parent=1 // pred_check
      _
    $region3: #{tpu_custom_call.1} parent=1 // pred_check_branch
      %12 = sbr.rel (0) target = $region5
    $region4: #{tpu_custom_call.1} parent=1 // pred_region
      _
    $region5: #{tpu_custom_call.1} parent=1 // pred_fallthru
      _
    // Predicated region
    $region6: #{tpu_custom_call.1} parent=1 // pred_check
      _
    $region7: #{tpu_custom_call.1} parent=1 // pred_check_branch
      %14 = sbr.rel (0) target = $region9
    $region8: #{tpu_custom_call.1} parent=1 // pred_region
      _
    $region9: #{tpu_custom_call.1} parent=1 // pred_fallthru
      _
    // Predicated region
    $region10: #{tpu_custom_call.1} parent=1 // pred_check
      _
    $region11: #{tpu_custom_call.1} parent=1 // pred_check_branch
      %16 = sbr.rel (0) target = $region13
    $region12: #{tpu_custom_call.1} parent=1 // pred_region
      _
    $region13: #{tpu_custom_call.1} parent=1 // pred_fallthru
      _
    // Predicated region
    $region14: #{tpu_custom_call.1} parent=1 // pred_check
      _
    $region15: #{tpu_custom_call.1} parent=1 // pred_check_branch
      %18 = sbr.rel (0) target = $region17
    $region16: #{tpu_custom_call.1} parent=1 // pred_region
      _
    $region17: #{tpu_custom_call.1} parent=1 // pred_fallthru
      _
    // Predicated region
    $region18: #{tpu_custom_call.1} parent=1 // pred_check
      _
    $region19: #{tpu_custom_call.1} parent=1 // pred_check_branch
      %20 = sbr.rel (0) target = $region21
    $region20: #{tpu_custom_call.1} parent=1 // pred_region
      _
    $region21: #{tpu_custom_call.1} parent=1 // pred_fallthru
      _
    %v22 = vld [vmem:[%s4] sm:$0xff]
    %v23 = vld [vmem:[%s4 + $0x8] sm:$0x3]
    %v24 = vpack.c.bf16 %v23, %v22
    %v25 = vld [vmem:[%s4 + $0x10] sm:$0xff]
    %v26 = vld [vmem:[%s4 + $0x18] sm:$0x3]
    %v27 = vpack.c.bf16 %v26, %v25
    %v28 = vld [vmem:[%s4 + $0x20] sm:$0xff]
    %v29 = vld [vmem:[%s4 + $0x28] sm:$0x3]
    %v30 = vpack.c.bf16 %v29, %v28
    %v31 = vld [vmem:[%s4 + $0x30] sm:$0x1]
    %v32 = vld [vmem:[%s4 + $0x31] sm:$0x1]
    %v33 = vld [vmem:[%s4 + $0x32] sm:$0x1]
    %v34 = vld [vmem:[%s4 + $0x33] sm:$0x1]
    %v35 = vld [vmem:[%s4 + $0x34] sm:$0x1]
    %v36 = vld [vmem:[%s4 + $0x35] sm:$0x1]
    %vm37 = vcmask 253952
    %38 = vst.msk [vmem:[#allocation2] sm:$0x1] %vm37, 0.0
    %vm39 = vcmask 778752
    %40 = vst.msk [vmem:[#allocation2 + $0x93] sm:$0x1] %vm39, 0.0
    %v41 = vld [vmem:[%s0] sm:$0xf]
    %v42 = vld [vmem:[%s0 + $0x4] sm:$0xf]
    %v43 = vld [vmem:[%s0 + $0x8] sm:$0xf]
    %v44 = vld [vmem:[%s0 + $0xc] sm:$0xf]
    %v45 = vld [vmem:[%s0 + $0x10] sm:$0xf]
    %v46 = vld [vmem:[%s0 + $0x14] sm:$0xf]
    %v47 = vld [vmem:[%s0 + $0x18] sm:$0xf]
    %v48 = vld [vmem:[%s0 + $0x1c] sm:$0xf]
    %v49 = vld [vmem:[%s0 + $0x20] sm:$0xf]
    %v50 = vld [vmem:[%s0 + $0x24] sm:$0xf]
    %v51 = vld [vmem:[%s0 + $0x28] sm:$0xf]
    %v52 = vld [vmem:[%s0 + $0x2c] sm:$0xf]
    %v53 = vld [vmem:[%s0 + $0x30] sm:$0xf]
    %v54 = vld [vmem:[%s0 + $0x34] sm:$0xf]
    %v55 = vld [vmem:[%s0 + $0x38] sm:$0xf]
    %v56 = vld [vmem:[%s0 + $0x3c] sm:$0xf]
    %v57 = vld [vmem:[%s0 + $0x40] sm:$0xf]
    %v58 = vld [vmem:[%s0 + $0x44] sm:$0xf]
    %v59 = vld [vmem:[%s0 + $0x48] sm:$0x3]
    %v60 = vunpack.c.l.bf16 %v41
    %v61 = vunpack.c.l.bf16 %v42
    %v62 = vunpack.c.l.bf16 %v43
    %v63 = vunpack.c.l.bf16 %v44
    %v64 = vunpack.c.l.bf16 %v45
    %v65 = vunpack.c.l.bf16 %v46
    %v66 = vunpack.c.l.bf16 %v47
    %v67 = vunpack.c.l.bf16 %v48
    %v68 = vunpack.c.l.bf16 %v49
    %v69 = vunpack.c.l.bf16 %v50
    %v70 = vunpack.c.l.bf16 %v51
    %v71 = vunpack.c.l.bf16 %v52
    %v72 = vunpack.c.l.bf16 %v53
    %v73 = vunpack.c.l.bf16 %v54
    %v74 = vunpack.c.l.bf16 %v55
    %v75 = vunpack.c.l.bf16 %v56
    %v76 = vunpack.c.l.bf16 %v57
    %v77 = vunpack.c.l.bf16 %v58
    %v78 = vunpack.c.l.bf16 %v59
    %vm79 = vcmask 261120
    %80 = vst.msk [vmem:[#allocation2 + $0x1] sm:$0xff] %vm79, %v60
    %81 = vst.msk [vmem:[#allocation2 + $0x9] sm:$0xff] %vm79, %v61
    %82 = vst.msk [vmem:[#allocation2 + $0x11] sm:$0xff] %vm79, %v62
    %83 = vst.msk [vmem:[#allocation2 + $0x19] sm:$0xff] %vm79, %v63
    %84 = vst.msk [vmem:[#allocation2 + $0x21] sm:$0xff] %vm79, %v64
    %85 = vst.msk [vmem:[#allocation2 + $0x29] sm:$0xff] %vm79, %v65
    %86 = vst.msk [vmem:[#allocation2 + $0x31] sm:$0xff] %vm79, %v66
    %87 = vst.msk [vmem:[#allocation2 + $0x39] sm:$0xff] %vm79, %v67
    %88 = vst.msk [vmem:[#allocation2 + $0x41] sm:$0xff] %vm79, %v68
    %89 = vst.msk [vmem:[#allocation2 + $0x49] sm:$0xff] %vm79, %v69
    %90 = vst.msk [vmem:[#allocation2 + $0x51] sm:$0xff] %vm79, %v70
    %91 = vst.msk [vmem:[#allocation2 + $0x59] sm:$0xff] %vm79, %v71
    %92 = vst.msk [vmem:[#allocation2 + $0x61] sm:$0xff] %vm79, %v72
    %93 = vst.msk [vmem:[#allocation2 + $0x69] sm:$0xff] %vm79, %v73
    %94 = vst.msk [vmem:[#allocation2 + $0x71] sm:$0xff] %vm79, %v74
    %95 = vst.msk [vmem:[#allocation2 + $0x79] sm:$0xff] %vm79, %v75
    %96 = vst.msk [vmem:[#allocation2 + $0x81] sm:$0xff] %vm79, %v76
    %97 = vst.msk [vmem:[#allocation2 + $0x89] sm:$0xff] %vm79, %v77
    %vm98 = vcmask 256000
    %99 = vst.msk [vmem:[#allocation2 + $0x91] sm:$0x7] %vm98, %v78
    %v100 = vld [vmem:[%s0] sm:$0xf]
    %v101 = vld [vmem:[%s0 + $0x4] sm:$0xf]
    %v102 = vld [vmem:[%s0 + $0x8] sm:$0xf]
    %v103 = vld [vmem:[%s0 + $0xc] sm:$0xf]
    %v104 = vld [vmem:[%s0 + $0x10] sm:$0xf]
    %v105 = vld [vmem:[%s0 + $0x14] sm:$0xf]
    %v106 = vld [vmem:[%s0 + $0x18] sm:$0xf]
    %v107 = vld [vmem:[%s0 + $0x1c] sm:$0xf]
    %v108 = vld [vmem:[%s0 + $0x20] sm:$0xf]
    %v109 = vld [vmem:[%s0 + $0x24] sm:$0xf]
    %v110 = vld [vmem:[%s0 + $0x28] sm:$0xf]
    %v111 = vld [vmem:[%s0 + $0x2c] sm:$0xf]
    %v112 = vld [vmem:[%s0 + $0x30] sm:$0xf]
    %v113 = vld [vmem:[%s0 + $0x34] sm:$0xf]
    %v114 = vld [vmem:[%s0 + $0x38] sm:$0xf]
    %v115 = vld [vmem:[%s0 + $0x3c] sm:$0xf]
    %v116 = vld [vmem:[%s0 + $0x40] sm:$0xf]
    %v117 = vld [vmem:[%s0 + $0x44] sm:$0xf]
    %v118 = vld [vmem:[%s0 + $0x48] sm:$0x3]
    %v119 = vunpack.c.l.bf16 %v100
    %v120 = vunpack.c.l.bf16 %v101
    %v121 = vunpack.c.l.bf16 %v102
    %v122 = vunpack.c.l.bf16 %v103
    %v123 = vunpack.c.l.bf16 %v104
    %v124 = vunpack.c.l.bf16 %v105
    %v125 = vunpack.c.l.bf16 %v106
    %v126 = vunpack.c.l.bf16 %v107
    %v127 = vunpack.c.l.bf16 %v108
    %v128 = vunpack.c.l.bf16 %v109
    %v129 = vunpack.c.l.bf16 %v110
    %v130 = vunpack.c.l.bf16 %v111
    %v131 = vunpack.c.l.bf16 %v112
    %v132 = vunpack.c.l.bf16 %v113
    %v133 = vunpack.c.l.bf16 %v114
    %v134 = vunpack.c.l.bf16 %v115
    %v135 = vunpack.c.l.bf16 %v116
    %v136 = vunpack.c.l.bf16 %v117
    %v137 = vunpack.c.l.bf16 %v118
    %157 = vrot.lane.b32.xlu0 %v119, 32
    %v158 = vpop.permute.xlu0 %157
    %159 = vrot.lane.b32.xlu0 %v120, 32
    %v160 = vpop.permute.xlu0 %159
    %161 = vrot.lane.b32.xlu0 %v121, 32
    %v162 = vpop.permute.xlu0 %161
    %163 = vrot.lane.b32.xlu0 %v122, 32
    %v164 = vpop.permute.xlu0 %163
    %165 = vrot.lane.b32.xlu0 %v123, 32
    %v166 = vpop.permute.xlu0 %165
    %167 = vrot.lane.b32.xlu0 %v124, 32
    %v168 = vpop.permute.xlu0 %167
    %169 = vrot.lane.b32.xlu0 %v125, 32
    %v170 = vpop.permute.xlu0 %169
    %171 = vrot.lane.b32.xlu0 %v126, 32
    %v172 = vpop.permute.xlu0 %171
    %173 = vrot.lane.b32.xlu0 %v127, 32
    %v174 = vpop.permute.xlu0 %173
    %175 = vrot.lane.b32.xlu0 %v128, 32
    %v176 = vpop.permute.xlu0 %175
    %177 = vrot.lane.b32.xlu0 %v129, 32
    %v178 = vpop.permute.xlu0 %177
    %179 = vrot.lane.b32.xlu0 %v130, 32
    %v180 = vpop.permute.xlu0 %179
    %181 = vrot.lane.b32.xlu0 %v131, 32
    %v182 = vpop.permute.xlu0 %181
    %183 = vrot.lane.b32.xlu0 %v132, 32
    %v184 = vpop.permute.xlu0 %183
    %185 = vrot.lane.b32.xlu0 %v133, 32
    %v186 = vpop.permute.xlu0 %185
    %187 = vrot.lane.b32.xlu0 %v134, 32
    %v188 = vpop.permute.xlu0 %187
    %189 = vrot.lane.b32.xlu0 %v135, 32
    %v190 = vpop.permute.xlu0 %189
    %191 = vrot.lane.b32.xlu0 %v136, 32
    %v192 = vpop.permute.xlu0 %191
    %193 = vrot.lane.b32.xlu0 %v137, 32
    %v194 = vpop.permute.xlu0 %193
    %vm214 = vcmask 523520
    %215 = vst.msk [vmem:[#allocation2] sm:$0xff] %vm214, %v158
    %216 = vst.msk [vmem:[#allocation2 + $0x8] sm:$0xff] %vm214, %v160
    %217 = vst.msk [vmem:[#allocation2 + $0x10] sm:$0xff] %vm214, %v162
    %218 = vst.msk [vmem:[#allocation2 + $0x18] sm:$0xff] %vm214, %v164
    %219 = vst.msk [vmem:[#allocation2 + $0x20] sm:$0xff] %vm214, %v166
    %220 = vst.msk [vmem:[#allocation2 + $0x28] sm:$0xff] %vm214, %v168
    %221 = vst.msk [vmem:[#allocation2 + $0x30] sm:$0xff] %vm214, %v170
    %222 = vst.msk [vmem:[#allocation2 + $0x38] sm:$0xff] %vm214, %v172
    %223 = vst.msk [vmem:[#allocation2 + $0x40] sm:$0xff] %vm214, %v174
    %224 = vst.msk [vmem:[#allocation2 + $0x48] sm:$0xff] %vm214, %v176
    %225 = vst.msk [vmem:[#allocation2 + $0x50] sm:$0xff] %vm214, %v178
    %226 = vst.msk [vmem:[#allocation2 + $0x58] sm:$0xff] %vm214, %v180
    %227 = vst.msk [vmem:[#allocation2 + $0x60] sm:$0xff] %vm214, %v182
    %228 = vst.msk [vmem:[#allocation2 + $0x68] sm:$0xff] %vm214, %v184
    %229 = vst.msk [vmem:[#allocation2 + $0x70] sm:$0xff] %vm214, %v186
    %230 = vst.msk [vmem:[#allocation2 + $0x78] sm:$0xff] %vm214, %v188
    %231 = vst.msk [vmem:[#allocation2 + $0x80] sm:$0xff] %vm214, %v190
    %232 = vst.msk [vmem:[#allocation2 + $0x88] sm:$0xff] %vm214, %v192
    %vm233 = vcmask 519424
    %234 = vst.msk [vmem:[#allocation2 + $0x90] sm:$0xf] %vm233, %v194
    %v235 = vld [vmem:[%s0] sm:$0xf]
    %v236 = vld [vmem:[%s0 + $0x4] sm:$0xf]
    %v237 = vld [vmem:[%s0 + $0x8] sm:$0xf]
    %v238 = vld [vmem:[%s0 + $0xc] sm:$0xf]
    %v239 = vld [vmem:[%s0 + $0x10] sm:$0xf]
    %v240 = vld [vmem:[%s0 + $0x14] sm:$0xf]
    %v241 = vld [vmem:[%s0 + $0x18] sm:$0xf]
    %v242 = vld [vmem:[%s0 + $0x1c] sm:$0xf]
    %v243 = vld [vmem:[%s0 + $0x20] sm:$0xf]
    %v244 = vld [vmem:[%s0 + $0x24] sm:$0xf]
    %v245 = vld [vmem:[%s0 + $0x28] sm:$0xf]
    %v246 = vld [vmem:[%s0 + $0x2c] sm:$0xf]
    %v247 = vld [vmem:[%s0 + $0x30] sm:$0xf]
    %v248 = vld [vmem:[%s0 + $0x34] sm:$0xf]
    %v249 = vld [vmem:[%s0 + $0x38] sm:$0xf]
    %v250 = vld [vmem:[%s0 + $0x3c] sm:$0xf]
    %v251 = vld [vmem:[%s0 + $0x40] sm:$0xf]
    %v252 = vld [vmem:[%s0 + $0x44] sm:$0xf]
    %v253 = vld [vmem:[%s0 + $0x48] sm:$0x3]
    %v254 = vunpack.c.l.bf16 %v235
    %v255 = vunpack.c.l.bf16 %v236
    %v256 = vunpack.c.l.bf16 %v237
    %v257 = vunpack.c.l.bf16 %v238
    %v258 = vunpack.c.l.bf16 %v239
    %v259 = vunpack.c.l.bf16 %v240
    %v260 = vunpack.c.l.bf16 %v241
    %v261 = vunpack.c.l.bf16 %v242
    %v262 = vunpack.c.l.bf16 %v243
    %v263 = vunpack.c.l.bf16 %v244
    %v264 = vunpack.c.l.bf16 %v245
    %v265 = vunpack.c.l.bf16 %v246
    %v266 = vunpack.c.l.bf16 %v247
    %v267 = vunpack.c.l.bf16 %v248
    %v268 = vunpack.c.l.bf16 %v249
    %v269 = vunpack.c.l.bf16 %v250
    %v270 = vunpack.c.l.bf16 %v251
    %v271 = vunpack.c.l.bf16 %v252
    %v272 = vunpack.c.l.bf16 %v253
    %292 = vrot.lane.b32.xlu0 %v254, 64
    %v293 = vpop.permute.xlu0 %292
    %294 = vrot.lane.b32.xlu0 %v255, 64
    %v295 = vpop.permute.xlu0 %294
    %296 = vrot.lane.b32.xlu0 %v256, 64
    %v297 = vpop.permute.xlu0 %296
    %298 = vrot.lane.b32.xlu0 %v257, 64
    %v299 = vpop.permute.xlu0 %298
    %300 = vrot.lane.b32.xlu0 %v258, 64
    %v301 = vpop.permute.xlu0 %300
    %302 = vrot.lane.b32.xlu0 %v259, 64
    %v303 = vpop.permute.xlu0 %302
    %304 = vrot.lane.b32.xlu0 %v260, 64
    %v305 = vpop.permute.xlu0 %304
    %306 = vrot.lane.b32.xlu0 %v261, 64
    %v307 = vpop.permute.xlu0 %306
    %308 = vrot.lane.b32.xlu0 %v262, 64
    %v309 = vpop.permute.xlu0 %308
    %310 = vrot.lane.b32.xlu0 %v263, 64
    %v311 = vpop.permute.xlu0 %310
    %312 = vrot.lane.b32.xlu0 %v264, 64
    %v313 = vpop.permute.xlu0 %312
    %314 = vrot.lane.b32.xlu0 %v265, 64
    %v315 = vpop.permute.xlu0 %314
    %316 = vrot.lane.b32.xlu0 %v266, 64
    %v317 = vpop.permute.xlu0 %316
    %318 = vrot.lane.b32.xlu0 %v267, 64
    %v319 = vpop.permute.xlu0 %318
    %320 = vrot.lane.b32.xlu0 %v268, 64
    %v321 = vpop.permute.xlu0 %320
    %322 = vrot.lane.b32.xlu0 %v269, 64
    %v323 = vpop.permute.xlu0 %322
    %324 = vrot.lane.b32.xlu0 %v270, 64
    %v325 = vpop.permute.xlu0 %324
    %326 = vrot.lane.b32.xlu0 %v271, 64
    %v327 = vpop.permute.xlu0 %326
    %328 = vrot.lane.b32.xlu0 %v272, 64
    %v329 = vpop.permute.xlu0 %328
    %vm349 = vcmask 785921
    %350 = vst.msk [vmem:[#allocation2 - $0x1] sm:$0xfe] %vm349, %v293
    %vm351 = vcmask 785920
    %352 = vst.msk [vmem:[#allocation2 + $0x7] sm:$0xff] %vm351, %v295
    %353 = vst.msk [vmem:[#allocation2 + $0xf] sm:$0xff] %vm351, %v297
    %354 = vst.msk [vmem:[#allocation2 + $0x17] sm:$0xff] %vm351, %v299
    %355 = vst.msk [vmem:[#allocation2 + $0x1f] sm:$0xff] %vm351, %v301
    %356 = vst.msk [vmem:[#allocation2 + $0x27] sm:$0xff] %vm351, %v303
    %357 = vst.msk [vmem:[#allocation2 + $0x2f] sm:$0xff] %vm351, %v305
    %358 = vst.msk [vmem:[#allocation2 + $0x37] sm:$0xff] %vm351, %v307
    %359 = vst.msk [vmem:[#allocation2 + $0x3f] sm:$0xff] %vm351, %v309
    %360 = vst.msk [vmem:[#allocation2 + $0x47] sm:$0xff] %vm351, %v311
    %361 = vst.msk [vmem:[#allocation2 + $0x4f] sm:$0xff] %vm351, %v313
    %362 = vst.msk [vmem:[#allocation2 + $0x57] sm:$0xff] %vm351, %v315
    %363 = vst.msk [vmem:[#allocation2 + $0x5f] sm:$0xff] %vm351, %v317
    %364 = vst.msk [vmem:[#allocation2 + $0x67] sm:$0xff] %vm351, %v319
    %365 = vst.msk [vmem:[#allocation2 + $0x6f] sm:$0xff] %vm351, %v321
    %366 = vst.msk [vmem:[#allocation2 + $0x77] sm:$0xff] %vm351, %v323
    %367 = vst.msk [vmem:[#allocation2 + $0x7f] sm:$0xff] %vm351, %v325
    %368 = vst.msk [vmem:[#allocation2 + $0x87] sm:$0xff] %vm351, %v327
    %vm369 = vcmask 781824
    %370 = vst.msk [vmem:[#allocation2 + $0x8f] sm:$0xf] %vm369, %v329
    %371 = vst.msk [vmem:[#allocation2 + $0x94] sm:$0x1] %vm37, 0.0
    %372 = vst.msk [vmem:[#allocation2 + $0x127] sm:$0x1] %vm39, 0.0
    %s373 = scalar_lea.vmem %s0, 76
    %v374 = vld [vmem:[%s373] sm:$0xf]
    %v375 = vld [vmem:[%s373 + $0x4] sm:$0xf]
    %v376 = vld [vmem:[%s373 + $0x8] sm:$0xf]
    %v377 = vld [vmem:[%s373 + $0xc] sm:$0xf]
    %v378 = vld [vmem:[%s373 + $0x10] sm:$0xf]
    %v379 = vld [vmem:[%s373 + $0x14] sm:$0xf]
    %v380 = vld [vmem:[%s373 + $0x18] sm:$0xf]
    %v381 = vld [vmem:[%s373 + $0x1c] sm:$0xf]
    %v382 = vld [vmem:[%s373 + $0x20] sm:$0xf]
    %v383 = vld [vmem:[%s373 + $0x24] sm:$0xf]
    %v384 = vld [vmem:[%s373 + $0x28] sm:$0xf]
    %v385 = vld [vmem:[%s373 + $0x2c] sm:$0xf]
    %v386 = vld [vmem:[%s373 + $0x30] sm:$0xf]
    %v387 = vld [vmem:[%s373 + $0x34] sm:$0xf]
    %v388 = vld [vmem:[%s373 + $0x38] sm:$0xf]
    %v389 = vld [vmem:[%s373 + $0x3c] sm:$0xf]
    %v390 = vld [vmem:[%s373 + $0x40] sm:$0xf]
    %v391 = vld [vmem:[%s373 + $0x44] sm:$0xf]
    %v392 = vld [vmem:[%s373 + $0x48] sm:$0x3]
    %v393 = vunpack.c.l.bf16 %v374
    %v394 = vunpack.c.l.bf16 %v375
    %v395 = vunpack.c.l.bf16 %v376
    %v396 = vunpack.c.l.bf16 %v377
    %v397 = vunpack.c.l.bf16 %v378
    %v398 = vunpack.c.l.bf16 %v379
    %v399 = vunpack.c.l.bf16 %v380
    %v400 = vunpack.c.l.bf16 %v381
    %v401 = vunpack.c.l.bf16 %v382
    %v402 = vunpack.c.l.bf16 %v383
    %v403 = vunpack.c.l.bf16 %v384
    %v404 = vunpack.c.l.bf16 %v385
    %v405 = vunpack.c.l.bf16 %v386
    %v406 = vunpack.c.l.bf16 %v387
    %v407 = vunpack.c.l.bf16 %v388
    %v408 = vunpack.c.l.bf16 %v389
    %v409 = vunpack.c.l.bf16 %v390
    %v410 = vunpack.c.l.bf16 %v391
    %v411 = vunpack.c.l.bf16 %v392
    %412 = vst.msk [vmem:[#allocation2 + $0x95] sm:$0xff] %vm79, %v393
    %413 = vst.msk [vmem:[#allocation2 + $0x9d] sm:$0xff] %vm79, %v394
    %414 = vst.msk [vmem:[#allocation2 + $0xa5] sm:$0xff] %vm79, %v395
    %415 = vst.msk [vmem:[#allocation2 + $0xad] sm:$0xff] %vm79, %v396
    %416 = vst.msk [vmem:[#allocation2 + $0xb5] sm:$0xff] %vm79, %v397
    %417 = vst.msk [vmem:[#allocation2 + $0xbd] sm:$0xff] %vm79, %v398
    %418 = vst.msk [vmem:[#allocation2 + $0xc5] sm:$0xff] %vm79, %v399
    %419 = vst.msk [vmem:[#allocation2 + $0xcd] sm:$0xff] %vm79, %v400
    %420 = vst.msk [vmem:[#allocation2 + $0xd5] sm:$0xff] %vm79, %v401
    %421 = vst.msk [vmem:[#allocation2 + $0xdd] sm:$0xff] %vm79, %v402
    %422 = vst.msk [vmem:[#allocation2 + $0xe5] sm:$0xff] %vm79, %v403
    %423 = vst.msk [vmem:[#allocation2 + $0xed] sm:$0xff] %vm79, %v404
    %424 = vst.msk [vmem:[#allocation2 + $0xf5] sm:$0xff] %vm79, %v405
    %425 = vst.msk [vmem:[#allocation2 + $0xfd] sm:$0xff] %vm79, %v406
    %426 = vst.msk [vmem:[#allocation2 + $0x105] sm:$0xff] %vm79, %v407
    %427 = vst.msk [vmem:[#allocation2 + $0x10d] sm:$0xff] %vm79, %v408
    %428 = vst.msk [vmem:[#allocation2 + $0x115] sm:$0xff] %vm79, %v409
    %429 = vst.msk [vmem:[#allocation2 + $0x11d] sm:$0xff] %vm79, %v410
    %430 = vst.msk [vmem:[#allocation2 + $0x125] sm:$0x7] %vm98, %v411
    %v431 = vld [vmem:[%s373] sm:$0xf]
    %v432 = vld [vmem:[%s373 + $0x4] sm:$0xf]
    %v433 = vld [vmem:[%s373 + $0x8] sm:$0xf]
    %v434 = vld [vmem:[%s373 + $0xc] sm:$0xf]
    %v435 = vld [vmem:[%s373 + $0x10] sm:$0xf]
    %v436 = vld [vmem:[%s373 + $0x14] sm:$0xf]
    %v437 = vld [vmem:[%s373 + $0x18] sm:$0xf]
    %v438 = vld [vmem:[%s373 + $0x1c] sm:$0xf]
    %v439 = vld [vmem:[%s373 + $0x20] sm:$0xf]
    %v440 = vld [vmem:[%s373 + $0x24] sm:$0xf]
    %v441 = vld [vmem:[%s373 + $0x28] sm:$0xf]
    %v442 = vld [vmem:[%s373 + $0x2c] sm:$0xf]
    %v443 = vld [vmem:[%s373 + $0x30] sm:$0xf]
    %v444 = vld [vmem:[%s373 + $0x34] sm:$0xf]
    %v445 = vld [vmem:[%s373 + $0x38] sm:$0xf]
    %v446 = vld [vmem:[%s373 + $0x3c] sm:$0xf]
    %v447 = vld [vmem:[%s373 + $0x40] sm:$0xf]
    %v448 = vld [vmem:[%s373 + $0x44] sm:$0xf]
    %v449 = vld [vmem:[%s373 + $0x48] sm:$0x3]
    %v450 = vunpack.c.l.bf16 %v431
    %v451 = vunpack.c.l.bf16 %v432
    %v452 = vunpack.c.l.bf16 %v433
    %v453 = vunpack.c.l.bf16 %v434
    %v454 = vunpack.c.l.bf16 %v435
    %v455 = vunpack.c.l.bf16 %v436
    %v456 = vunpack.c.l.bf16 %v437
    %v457 = vunpack.c.l.bf16 %v438
    %v458 = vunpack.c.l.bf16 %v439
    %v459 = vunpack.c.l.bf16 %v440
    %v460 = vunpack.c.l.bf16 %v441
    %v461 = vunpack.c.l.bf16 %v442
    %v462 = vunpack.c.l.bf16 %v443
    %v463 = vunpack.c.l.bf16 %v444
    %v464 = vunpack.c.l.bf16 %v445
    %v465 = vunpack.c.l.bf16 %v446
    %v466 = vunpack.c.l.bf16 %v447
    %v467 = vunpack.c.l.bf16 %v448
    %v468 = vunpack.c.l.bf16 %v449
    %488 = vrot.lane.b32.xlu0 %v450, 32
    %v489 = vpop.permute.xlu0 %488
    %490 = vrot.lane.b32.xlu0 %v451, 32
    %v491 = vpop.permute.xlu0 %490
    %492 = vrot.lane.b32.xlu0 %v452, 32
    %v493 = vpop.permute.xlu0 %492
    %494 = vrot.lane.b32.xlu0 %v453, 32
    %v495 = vpop.permute.xlu0 %494
    %496 = vrot.lane.b32.xlu0 %v454, 32
    %v497 = vpop.permute.xlu0 %496
    %498 = vrot.lane.b32.xlu0 %v455, 32
    %v499 = vpop.permute.xlu0 %498
    %500 = vrot.lane.b32.xlu0 %v456, 32
    %v501 = vpop.permute.xlu0 %500
    %502 = vrot.lane.b32.xlu0 %v457, 32
    %v503 = vpop.permute.xlu0 %502
    %504 = vrot.lane.b32.xlu0 %v458, 32
    %v505 = vpop.permute.xlu0 %504
    %506 = vrot.lane.b32.xlu0 %v459, 32
    %v507 = vpop.permute.xlu0 %506
    %508 = vrot.lane.b32.xlu0 %v460, 32
    %v509 = vpop.permute.xlu0 %508
    %510 = vrot.lane.b32.xlu0 %v461, 32
    %v511 = vpop.permute.xlu0 %510
    %512 = vrot.lane.b32.xlu0 %v462, 32
    %v513 = vpop.permute.xlu0 %512
    %514 = vrot.lane.b32.xlu0 %v463, 32
    %v515 = vpop.permute.xlu0 %514
    %516 = vrot.lane.b32.xlu0 %v464, 32
    %v517 = vpop.permute.xlu0 %516
    %518 = vrot.lane.b32.xlu0 %v465, 32
    %v519 = vpop.permute.xlu0 %518
    %520 = vrot.lane.b32.xlu0 %v466, 32
    %v521 = vpop.permute.xlu0 %520
    %522 = vrot.lane.b32.xlu0 %v467, 32
    %v523 = vpop.permute.xlu0 %522
    %524 = vrot.lane.b32.xlu0 %v468, 32
    %v525 = vpop.permute.xlu0 %524
    %545 = vst.msk [vmem:[#allocation2 + $0x94] sm:$0xff] %vm214, %v489
    %546 = vst.msk [vmem:[#allocation2 + $0x9c] sm:$0xff] %vm214, %v491
    %547 = vst.msk [vmem:[#allocation2 + $0xa4] sm:$0xff] %vm214, %v493
    %548 = vst.msk [vmem:[#allocation2 + $0xac] sm:$0xff] %vm214, %v495
    %549 = vst.msk [vmem:[#allocation2 + $0xb4] sm:$0xff] %vm214, %v497
    %550 = vst.msk [vmem:[#allocation2 + $0xbc] sm:$0xff] %vm214, %v499
    %551 = vst.msk [vmem:[#allocation2 + $0xc4] sm:$0xff] %vm214, %v501
    %552 = vst.msk [vmem:[#allocation2 + $0xcc] sm:$0xff] %vm214, %v503
    %553 = vst.msk [vmem:[#allocation2 + $0xd4] sm:$0xff] %vm214, %v505
    %554 = vst.msk [vmem:[#allocation2 + $0xdc] sm:$0xff] %vm214, %v507
    %555 = vst.msk [vmem:[#allocation2 + $0xe4] sm:$0xff] %vm214, %v509
    %556 = vst.msk [vmem:[#allocation2 + $0xec] sm:$0xff] %vm214, %v511
    %557 = vst.msk [vmem:[#allocation2 + $0xf4] sm:$0xff] %vm214, %v513
    %558 = vst.msk [vmem:[#allocation2 + $0xfc] sm:$0xff] %vm214, %v515
    %559 = vst.msk [vmem:[#allocation2 + $0x104] sm:$0xff] %vm214, %v517
    %560 = vst.msk [vmem:[#allocation2 + $0x10c] sm:$0xff] %vm214, %v519
    %561 = vst.msk [vmem:[#allocation2 + $0x114] sm:$0xff] %vm214, %v521
    %562 = vst.msk [vmem:[#allocation2 + $0x11c] sm:$0xff] %vm214, %v523
    %563 = vst.msk [vmem:[#allocation2 + $0x124] sm:$0xf] %vm233, %v525
    %v564 = vld [vmem:[%s373] sm:$0xf]
    %v565 = vld [vmem:[%s373 + $0x4] sm:$0xf]
    %v566 = vld [vmem:[%s373 + $0x8] sm:$0xf]
    %v567 = vld [vmem:[%s373 + $0xc] sm:$0xf]
    %v568 = vld [vmem:[%s373 + $0x10] sm:$0xf]
    %v569 = vld [vmem:[%s373 + $0x14] sm:$0xf]
    %v570 = vld [vmem:[%s373 + $0x18] sm:$0xf]
    %v571 = vld [vmem:[%s373 + $0x1c] sm:$0xf]
    %v572 = vld [vmem:[%s373 + $0x20] sm:$0xf]
    %v573 = vld [vmem:[%s373 + $0x24] sm:$0xf]
    %v574 = vld [vmem:[%s373 + $0x28] sm:$0xf]
    %v575 = vld [vmem:[%s373 + $0x2c] sm:$0xf]
    %v576 = vld [vmem:[%s373 + $0x30] sm:$0xf]
    %v577 = vld [vmem:[%s373 + $0x34] sm:$0xf]
    %v578 = vld [vmem:[%s373 + $0x38] sm:$0xf]
    %v579 = vld [vmem:[%s373 + $0x3c] sm:$0xf]
    %v580 = vld [vmem:[%s373 + $0x40] sm:$0xf]
    %v581 = vld [vmem:[%s373 + $0x44] sm:$0xf]
    %v582 = vld [vmem:[%s373 + $0x48] sm:$0x3]
    %v583 = vunpack.c.l.bf16 %v564
    %v584 = vunpack.c.l.bf16 %v565
    %v585 = vunpack.c.l.bf16 %v566
    %v586 = vunpack.c.l.bf16 %v567
    %v587 = vunpack.c.l.bf16 %v568
    %v588 = vunpack.c.l.bf16 %v569
    %v589 = vunpack.c.l.bf16 %v570
    %v590 = vunpack.c.l.bf16 %v571
    %v591 = vunpack.c.l.bf16 %v572
    %v592 = vunpack.c.l.bf16 %v573
    %v593 = vunpack.c.l.bf16 %v574
    %v594 = vunpack.c.l.bf16 %v575
    %v595 = vunpack.c.l.bf16 %v576
    %v596 = vunpack.c.l.bf16 %v577
    %v597 = vunpack.c.l.bf16 %v578
    %v598 = vunpack.c.l.bf16 %v579
    %v599 = vunpack.c.l.bf16 %v580
    %v600 = vunpack.c.l.bf16 %v581
    %v601 = vunpack.c.l.bf16 %v582
    %621 = vrot.lane.b32.xlu0 %v583, 64
    %v622 = vpop.permute.xlu0 %621
    %623 = vrot.lane.b32.xlu0 %v584, 64
    %v624 = vpop.permute.xlu0 %623
    %625 = vrot.lane.b32.xlu0 %v585, 64
    %v626 = vpop.permute.xlu0 %625
    %627 = vrot.lane.b32.xlu0 %v586, 64
    %v628 = vpop.permute.xlu0 %627
    %629 = vrot.lane.b32.xlu0 %v587, 64
    %v630 = vpop.permute.xlu0 %629
    %631 = vrot.lane.b32.xlu0 %v588, 64
    %v632 = vpop.permute.xlu0 %631
    %633 = vrot.lane.b32.xlu0 %v589, 64
    %v634 = vpop.permute.xlu0 %633
    %635 = vrot.lane.b32.xlu0 %v590, 64
    %v636 = vpop.permute.xlu0 %635
    %637 = vrot.lane.b32.xlu0 %v591, 64
    %v638 = vpop.permute.xlu0 %637
    %639 = vrot.lane.b32.xlu0 %v592, 64
    %v640 = vpop.permute.xlu0 %639
    %641 = vrot.lane.b32.xlu0 %v593, 64
    %v642 = vpop.permute.xlu0 %641
    %643 = vrot.lane.b32.xlu0 %v594, 64
    %v644 = vpop.permute.xlu0 %643
    %645 = vrot.lane.b32.xlu0 %v595, 64
    %v646 = vpop.permute.xlu0 %645
    %647 = vrot.lane.b32.xlu0 %v596, 64
    %v648 = vpop.permute.xlu0 %647
    %649 = vrot.lane.b32.xlu0 %v597, 64
    %v650 = vpop.permute.xlu0 %649
    %651 = vrot.lane.b32.xlu0 %v598, 64
    %v652 = vpop.permute.xlu0 %651
    %653 = vrot.lane.b32.xlu0 %v599, 64
    %v654 = vpop.permute.xlu0 %653
    %655 = vrot.lane.b32.xlu0 %v600, 64
    %v656 = vpop.permute.xlu0 %655
    %657 = vrot.lane.b32.xlu0 %v601, 64
    %v658 = vpop.permute.xlu0 %657
    %678 = vst.msk [vmem:[#allocation2 + $0x93] sm:$0xfe] %vm349, %v622
    %679 = vst.msk [vmem:[#allocation2 + $0x9b] sm:$0xff] %vm351, %v624
    %680 = vst.msk [vmem:[#allocation2 + $0xa3] sm:$0xff] %vm351, %v626
    %681 = vst.msk [vmem:[#allocation2 + $0xab] sm:$0xff] %vm351, %v628
    %682 = vst.msk [vmem:[#allocation2 + $0xb3] sm:$0xff] %vm351, %v630
    %683 = vst.msk [vmem:[#allocation2 + $0xbb] sm:$0xff] %vm351, %v632
    %684 = vst.msk [vmem:[#allocation2 + $0xc3] sm:$0xff] %vm351, %v634
    %685 = vst.msk [vmem:[#allocation2 + $0xcb] sm:$0xff] %vm351, %v636
    %686 = vst.msk [vmem:[#allocation2 + $0xd3] sm:$0xff] %vm351, %v638
    %687 = vst.msk [vmem:[#allocation2 + $0xdb] sm:$0xff] %vm351, %v640
    %688 = vst.msk [vmem:[#allocation2 + $0xe3] sm:$0xff] %vm351, %v642
    %689 = vst.msk [vmem:[#allocation2 + $0xeb] sm:$0xff] %vm351, %v644
    %690 = vst.msk [vmem:[#allocation2 + $0xf3] sm:$0xff] %vm351, %v646
    %691 = vst.msk [vmem:[#allocation2 + $0xfb] sm:$0xff] %vm351, %v648
    %692 = vst.msk [vmem:[#allocation2 + $0x103] sm:$0xff] %vm351, %v650
    %693 = vst.msk [vmem:[#allocation2 + $0x10b] sm:$0xff] %vm351, %v652
    %694 = vst.msk [vmem:[#allocation2 + $0x113] sm:$0xff] %vm351, %v654
    %695 = vst.msk [vmem:[#allocation2 + $0x11b] sm:$0xff] %vm351, %v656
    %696 = vst.msk [vmem:[#allocation2 + $0x123] sm:$0xf] %vm369, %v658
    %v697 = vld [vmem:[#allocation2] ss:$2 sm:$0xff]
    %s698 = scalar_lea.vmem [#allocation2], 16
    %v699 = vld [vmem:[%s698] ss:$2 sm:$0xff]
    %s700 = scalar_lea.vmem [#allocation2], 32
    %v701 = vld [vmem:[%s700] ss:$2 sm:$0xff]
    %s702 = scalar_lea.vmem [#allocation2], 48
    %v703 = vld [vmem:[%s702] ss:$2 sm:$0xff]
    %s704 = scalar_lea.vmem [#allocation2], 64
    %v705 = vld [vmem:[%s704] ss:$2 sm:$0xff]
    %s706 = scalar_lea.vmem [#allocation2], 80
    %v707 = vld [vmem:[%s706] ss:$2 sm:$0xff]
    %s708 = scalar_lea.vmem [#allocation2], 96
    %v709 = vld [vmem:[%s708] ss:$2 sm:$0xff]
    %s710 = scalar_lea.vmem [#allocation2], 112
    %v711 = vld [vmem:[%s710] ss:$2 sm:$0xff]
    %s712 = scalar_lea.vmem [#allocation2], 128
    %v713 = vld [vmem:[%s712] ss:$2 sm:$0xff]
    %s714 = scalar_lea.vmem [#allocation2], 144
    %v715 = vld [vmem:[%s714] ss:$2 sm:$0xff]
    %s716 = scalar_lea.vmem [#allocation2], 160
    %v717 = vld [vmem:[%s716] ss:$2 sm:$0xff]
    %s718 = scalar_lea.vmem [#allocation2], 176
    %v719 = vld [vmem:[%s718] ss:$2 sm:$0xff]
    %s720 = scalar_lea.vmem [#allocation2], 192
    %v721 = vld [vmem:[%s720] ss:$2 sm:$0xff]
    %s722 = scalar_lea.vmem [#allocation2], 208
    %v723 = vld [vmem:[%s722] ss:$2 sm:$0xff]
    %s724 = scalar_lea.vmem [#allocation2], 224
    %v725 = vld [vmem:[%s724] ss:$2 sm:$0xff]
    %s726 = scalar_lea.vmem [#allocation2], 240
    %v727 = vld [vmem:[%s726] ss:$2 sm:$0xff]
    %s728 = scalar_lea.vmem [#allocation2], 256
    %v729 = vld [vmem:[%s728] ss:$2 sm:$0xff]
    %s730 = scalar_lea.vmem [#allocation2], 272
    %v731 = vld [vmem:[%s730] ss:$2 sm:$0xff]
    %s732 = scalar_lea.vmem [#allocation2], 288
    %v733 = vld [vmem:[%s732] ss:$2 sm:$0xf]
    %v734 = vpack.c.bf16 %v699, %v697
    %v735 = vpack.c.bf16 %v703, %v701
    %v736 = vpack.c.bf16 %v707, %v705
    %v737 = vpack.c.bf16 %v711, %v709
    %v738 = vpack.c.bf16 %v715, %v713
    %v739 = vpack.c.bf16 %v719, %v717
    %v740 = vpack.c.bf16 %v723, %v721
    %v741 = vpack.c.bf16 %v727, %v725
    %v742 = vpack.c.bf16 %v731, %v729
    %v743 = vpack.c.bf16 %v733, %v733
    %s744 = scalar_lea.vmem [#allocation2], 1
    %v745 = vld [vmem:[%s744] ss:$2 sm:$0xff]
    %s746 = scalar_lea.vmem [#allocation2], 17
    %v747 = vld [vmem:[%s746] ss:$2 sm:$0xff]
    %s748 = scalar_lea.vmem [#allocation2], 33
    %v749 = vld [vmem:[%s748] ss:$2 sm:$0xff]
    %s750 = scalar_lea.vmem [#allocation2], 49
    %v751 = vld [vmem:[%s750] ss:$2 sm:$0xff]
    %s752 = scalar_lea.vmem [#allocation2], 65
    %v753 = vld [vmem:[%s752] ss:$2 sm:$0xff]
    %s754 = scalar_lea.vmem [#allocation2], 81
    %v755 = vld [vmem:[%s754] ss:$2 sm:$0xff]
    %s756 = scalar_lea.vmem [#allocation2], 97
    %v757 = vld [vmem:[%s756] ss:$2 sm:$0xff]
    %s758 = scalar_lea.vmem [#allocation2], 113
    %v759 = vld [vmem:[%s758] ss:$2 sm:$0xff]
    %s760 = scalar_lea.vmem [#allocation2], 129
    %v761 = vld [vmem:[%s760] ss:$2 sm:$0xff]
    %s762 = scalar_lea.vmem [#allocation2], 145
    %v763 = vld [vmem:[%s762] ss:$2 sm:$0xff]
    %s764 = scalar_lea.vmem [#allocation2], 161
    %v765 = vld [vmem:[%s764] ss:$2 sm:$0xff]
    %s766 = scalar_lea.vmem [#allocation2], 177
    %v767 = vld [vmem:[%s766] ss:$2 sm:$0xff]
    %s768 = scalar_lea.vmem [#allocation2], 193
    %v769 = vld [vmem:[%s768] ss:$2 sm:$0xff]
    %s770 = scalar_lea.vmem [#allocation2], 209
    %v771 = vld [vmem:[%s770] ss:$2 sm:$0xff]
    %s772 = scalar_lea.vmem [#allocation2], 225
    %v773 = vld [vmem:[%s772] ss:$2 sm:$0xff]
    %s774 = scalar_lea.vmem [#allocation2], 241
    %v775 = vld [vmem:[%s774] ss:$2 sm:$0xff]
    %s776 = scalar_lea.vmem [#allocation2], 257
    %v777 = vld [vmem:[%s776] ss:$2 sm:$0xff]
    %s778 = scalar_lea.vmem [#allocation2], 273
    %v779 = vld [vmem:[%s778] ss:$2 sm:$0xff]
    %s780 = scalar_lea.vmem [#allocation2], 289
    %v781 = vld [vmem:[%s780] ss:$2 sm:$0xf]
    %v782 = vpack.c.bf16 %v747, %v745
    %v783 = vpack.c.bf16 %v751, %v749
    %v784 = vpack.c.bf16 %v755, %v753
    %v785 = vpack.c.bf16 %v759, %v757
    %v786 = vpack.c.bf16 %v763, %v761
    %v787 = vpack.c.bf16 %v767, %v765
    %v788 = vpack.c.bf16 %v771, %v769
    %v789 = vpack.c.bf16 %v775, %v773
    %v790 = vpack.c.bf16 %v779, %v777
    %v791 = vpack.c.bf16 %v781, %v781
    %v792 = vld [vmem:[%s1] sm:$0xf]
    %v793 = vld [vmem:[%s1 + $0x4] sm:$0xf]
    %v794 = vld [vmem:[%s1 + $0x8] sm:$0xf]
    %v795 = vld [vmem:[%s1 + $0xc] sm:$0xf]
    %v796 = vld [vmem:[%s1 + $0x10] sm:$0xf]
    %v797 = vld [vmem:[%s1 + $0x14] sm:$0xf]
    %v798 = vld [vmem:[%s1 + $0x18] sm:$0xf]
    %v799 = vld [vmem:[%s1 + $0x1c] sm:$0xf]
    %v800 = vld [vmem:[%s1 + $0x20] sm:$0xf]
    %v801 = vld [vmem:[%s1 + $0x24] sm:$0xf]
    %v802 = vld [vmem:[%s1 + $0x28] sm:$0xf]
    %v803 = vld [vmem:[%s1 + $0x2c] sm:$0xf]
    %v804 = vlaneseq
    %v805 = vshrl.u32 %v804, 7
    %v806 = vsub.s32 0, %v805
    %v807 = vrot.slane %v31, %v806
    %v820 = vunpack.c.l.b16 %v792
    %v821 = vunpack.c.l.b16 %v793
    %v822 = vunpack.c.l.b16 %v794
    %v823 = vunpack.c.l.b16 %v795
    %v824 = vunpack.c.l.b16 %v796
    %v825 = vunpack.c.l.b16 %v797
    %v826 = vunpack.c.l.b16 %v798
    %v827 = vunpack.c.l.b16 %v799
    %v828 = vunpack.c.l.b16 %v800
    %v829 = vunpack.c.l.b16 %v801
    %v830 = vunpack.c.l.b16 %v802
    %v831 = vunpack.c.l.b16 %v803
    %v832 = vpack.c.b16 %v821, %v820
    %v833 = vpack.c.b16 %v823, %v822
    %v834 = vpack.c.b16 %v825, %v824
    %v835 = vpack.c.b16 %v827, %v826
    %v836 = vpack.c.b16 %v829, %v828
    %v837 = vpack.c.b16 %v831, %v830
    %vm844 = vcmask 785408
    %v846 = vsel %vm844, %v734, 0
    %v849 = vsel %vm844, %v735, 0
    %v852 = vsel %vm844, %v736, 0
    %v855 = vsel %vm844, %v737, 0
    %v858 = vsel %vm844, %v738, 0
    %v861 = vsel %vm844, %v739, 0
    %v864 = vsel %vm844, %v740, 0
    %v867 = vsel %vm844, %v741, 0
    %v870 = vsel %vm844, %v742, 0
    %v873 = vsel %vm844, %v743, 0
    %875 = vmatprep.subr.bf16.mxu0 0
    %876 = vmatpush1.bf16.msra.mxu0 %v832
    %877 = vmatprep.subr.bf16.mxu0 0
    %878 = vmatpush1.bf16.msra.mxu0 %v833
    %879 = vmatprep.subr.bf16.mxu0 0
    %880 = vmatpush1.bf16.msra.mxu0 %v834
    %881 = vmatprep.subr.bf16.mxu0 0
    %882 = vmatpush1.bf16.msra.mxu0 %v835
    %883 = vmatprep.subr.bf16.mxu0 0
    %884 = vmatpush1.bf16.msra.mxu0 %v836
    %885 = vmatprep.subr.bf16.mxu0 0
    %886 = vmatpush1.bf16.msra.mxu0 %v837
    %887 = vmatprep.subr.bf16.mxu0 0
    %888 = vmatpush1.bf16.msra.mxu0 0
    %889 = vmatprep.subr.bf16.mxu0 0
    %890 = vmatpush1.bf16.msra.mxu0 0
    %891 = vmatprep.subr.bf16.mxu0 0
    %892 = vmatpush1.bf16.msra.mxu0 0
    %893 = vmatprep.subr.bf16.mxu0 0
    %894 = vmatpush1.bf16.msra.mxu0 0
    %895 = vmatprep.subr.bf16.mxu0 0
    %896 = vmatpush1.bf16.msra.mxu0 0
    %897 = vmatprep.subr.bf16.mxu0 0
    %898 = vmatpush1.bf16.msra.mxu0 0
    %899 = vmatprep.subr.bf16.mxu0 0
    %900 = vmatpush1.bf16.msra.mxu0 0
    %901 = vmatprep.subr.bf16.mxu0 0
    %902 = vmatpush1.bf16.msra.mxu0 0
    %903 = vmatprep.subr.bf16.mxu0 0
    %904 = vmatpush1.bf16.msra.mxu0 0
    %905 = vmatprep.subr.bf16.mxu0 0
    %906 = vmatpush1.bf16.msra.mxu0 0
    %907 = vmatprep.mubr.bf16.mxu0 0
    %908 = vmatmul.mubr.bf16.gmra.mrb[0].mxu0 %v846
    %v909 = vpop.f32.mrb[0].mxu0
    %v910 = vadd.f32 %v807, %v909
    %v911 = vpop.f32.mrb[0].mxu0
    %v912 = vpop.f32.mrb[0].mxu0
    %v913 = vadd.f32 %v807, %v912
    %v914 = vpop.f32.mrb[0].mxu0
    %915 = vmatprep.mubr.bf16.mxu0 0
    %916 = vmatmul.mubr.bf16.gmra.mrb[0].mxu0 %v849
    %v917 = vpop.f32.mrb[0].mxu0
    %v918 = vadd.f32 %v807, %v917
    %v919 = vpop.f32.mrb[0].mxu0
    %v920 = vpop.f32.mrb[0].mxu0
    %v921 = vadd.f32 %v807, %v920
    %v922 = vpop.f32.mrb[0].mxu0
    %923 = vmatprep.mubr.bf16.mxu0 0
    %924 = vmatmul.mubr.bf16.gmra.mrb[0].mxu0 %v852
    %v925 = vpop.f32.mrb[0].mxu0
    %v926 = vadd.f32 %v807, %v925
    %v927 = vpop.f32.mrb[0].mxu0
    %v928 = vpop.f32.mrb[0].mxu0
    %v929 = vadd.f32 %v807, %v928
    %v930 = vpop.f32.mrb[0].mxu0
    %931 = vmatprep.mubr.bf16.mxu0 0
    %932 = vmatmul.mubr.bf16.gmra.mrb[0].mxu0 %v855
    %v933 = vpop.f32.mrb[0].mxu0
    %v934 = vadd.f32 %v807, %v933
    %v935 = vpop.f32.mrb[0].mxu0
    %v936 = vpop.f32.mrb[0].mxu0
    %v937 = vadd.f32 %v807, %v936
    %v938 = vpop.f32.mrb[0].mxu0
    %939 = vmatprep.mubr.bf16.mxu0 0
    %940 = vmatmul.mubr.bf16.gmra.mrb[0].mxu0 %v858
    %v941 = vpop.f32.mrb[0].mxu0
    %v942 = vadd.f32 %v807, %v941
    %v943 = vpop.f32.mrb[0].mxu0
    %v944 = vpop.f32.mrb[0].mxu0
    %v945 = vadd.f32 %v807, %v944
    %v946 = vpop.f32.mrb[0].mxu0
    %947 = vmatprep.mubr.bf16.mxu0 0
    %948 = vmatmul.mubr.bf16.gmra.mrb[0].mxu0 %v861
    %v949 = vpop.f32.mrb[0].mxu0
    %v950 = vadd.f32 %v807, %v949
    %v951 = vpop.f32.mrb[0].mxu0
    %v952 = vpop.f32.mrb[0].mxu0
    %v953 = vadd.f32 %v807, %v952
    %v954 = vpop.f32.mrb[0].mxu0
    %955 = vmatprep.mubr.bf16.mxu0 0
    %956 = vmatmul.mubr.bf16.gmra.mrb[0].mxu0 %v864
    %v957 = vpop.f32.mrb[0].mxu0
    %v958 = vadd.f32 %v807, %v957
    %v959 = vpop.f32.mrb[0].mxu0
    %v960 = vpop.f32.mrb[0].mxu0
    %v961 = vadd.f32 %v807, %v960
    %v962 = vpop.f32.mrb[0].mxu0
    %963 = vmatprep.mubr.bf16.mxu0 0
    %964 = vmatmul.mubr.bf16.gmra.mrb[0].mxu0 %v867
    %v965 = vpop.f32.mrb[0].mxu0
    %v966 = vadd.f32 %v807, %v965
    %v967 = vpop.f32.mrb[0].mxu0
    %v968 = vpop.f32.mrb[0].mxu0
    %v969 = vadd.f32 %v807, %v968
    %v970 = vpop.f32.mrb[0].mxu0
    %971 = vmatprep.mubr.bf16.mxu0 0
    %972 = vmatmul.mubr.bf16.gmra.mrb[0].mxu0 %v870
    %v973 = vpop.f32.mrb[0].mxu0
    %v974 = vadd.f32 %v807, %v973
    %v975 = vpop.f32.mrb[0].mxu0
    %v976 = vpop.f32.mrb[0].mxu0
    %v977 = vadd.f32 %v807, %v976
    %v978 = vpop.f32.mrb[0].mxu0
    %979 = vmatprep.mubr.bf16.mxu0 0
    %980 = vmatmul.mubr.bf16.gmra.mrb[0].mxu0 %v873
    %v981 = vpop.f32.mrb[0].mxu0
    %v982 = vadd.f32 %v807, %v981
    %v983 = vpop.f32.mrb[0].mxu0
    %v984 = vpop.f32.mrb[0].mxu0
    %v985 = vpop.f32.mrb[0].mxu0
    %986 = vdwg.mxu0
    %v988 = vsel %vm844, %v782, 0
    %v991 = vsel %vm844, %v783, 0
    %v994 = vsel %vm844, %v784, 0
    %v997 = vsel %vm844, %v785, 0
    %v1000 = vsel %vm844, %v786, 0
    %v1003 = vsel %vm844, %v787, 0
    %v1006 = vsel %vm844, %v788, 0
    %v1009 = vsel %vm844, %v789, 0
    %v1012 = vsel %vm844, %v790, 0
    %v1015 = vsel %vm844, %v791, 0
    %1017 = vmatprep.subr.bf16.mxu0 0
    %1018 = vmatpush1.bf16.msra.mxu0 %v832
    %1019 = vmatprep.subr.bf16.mxu0 0
    %1020 = vmatpush1.bf16.msra.mxu0 %v833
    %1021 = vmatprep.subr.bf16.mxu0 0
    %1022 = vmatpush1.bf16.msra.mxu0 %v834
    %1023 = vmatprep.subr.bf16.mxu0 0
    %1024 = vmatpush1.bf16.msra.mxu0 %v835
    %1025 = vmatprep.subr.bf16.mxu0 0
    %1026 = vmatpush1.bf16.msra.mxu0 %v836
    %1027 = vmatprep.subr.bf16.mxu0 0
    %1028 = vmatpush1.bf16.msra.mxu0 %v837
    %1029 = vmatprep.subr.bf16.mxu0 0
    %1030 = vmatpush1.bf16.msra.mxu0 0
    %1031 = vmatprep.subr.bf16.mxu0 0
    %1032 = vmatpush1.bf16.msra.mxu0 0
    %1033 = vmatprep.subr.bf16.mxu0 0
    %1034 = vmatpush1.bf16.msra.mxu0 0
    %1035 = vmatprep.subr.bf16.mxu0 0
    %1036 = vmatpush1.bf16.msra.mxu0 0
    %1037 = vmatprep.subr.bf16.mxu0 0
    %1038 = vmatpush1.bf16.msra.mxu0 0
    %1039 = vmatprep.subr.bf16.mxu0 0
    %1040 = vmatpush1.bf16.msra.mxu0 0
    %1041 = vmatprep.subr.bf16.mxu0 0
    %1042 = vmatpush1.bf16.msra.mxu0 0
    %1043 = vmatprep.subr.bf16.mxu0 0
    %1044 = vmatpush1.bf16.msra.mxu0 0
    %1045 = vmatprep.subr.bf16.mxu0 0
    %1046 = vmatpush1.bf16.msra.mxu0 0
    %1047 = vmatprep.subr.bf16.mxu0 0
    %1048 = vmatpush1.bf16.msra.mxu0 0
    %1049 = vmatprep.mubr.bf16.mxu0 0
    %1050 = vmatmul.mubr.bf16.gmra.mrb[0].mxu0 %v988
    %v1051 = vpop.f32.mrb[0].mxu0
    %v1052 = vadd.f32 %v807, %v1051
    %v1053 = vpop.f32.mrb[0].mxu0
    %v1054 = vpop.f32.mrb[0].mxu0
    %v1055 = vadd.f32 %v807, %v1054
    %v1056 = vpop.f32.mrb[0].mxu0
    %1057 = vmatprep.mubr.bf16.mxu0 0
    %1058 = vmatmul.mubr.bf16.gmra.mrb[0].mxu0 %v991
    %v1059 = vpop.f32.mrb[0].mxu0
    %v1060 = vadd.f32 %v807, %v1059
    %v1061 = vpop.f32.mrb[0].mxu0
    %v1062 = vpop.f32.mrb[0].mxu0
    %v1063 = vadd.f32 %v807, %v1062
    %v1064 = vpop.f32.mrb[0].mxu0
    %1065 = vmatprep.mubr.bf16.mxu0 0
    %1066 = vmatmul.mubr.bf16.gmra.mrb[0].mxu0 %v994
    %v1067 = vpop.f32.mrb[0].mxu0
    %v1068 = vadd.f32 %v807, %v1067
    %v1069 = vpop.f32.mrb[0].mxu0
    %v1070 = vpop.f32.mrb[0].mxu0
    %v1071 = vadd.f32 %v807, %v1070
    %v1072 = vpop.f32.mrb[0].mxu0
    %1073 = vmatprep.mubr.bf16.mxu0 0
    %1074 = vmatmul.mubr.bf16.gmra.mrb[0].mxu0 %v997
    %v1075 = vpop.f32.mrb[0].mxu0
    %v1076 = vadd.f32 %v807, %v1075
    %v1077 = vpop.f32.mrb[0].mxu0
    %v1078 = vpop.f32.mrb[0].mxu0
    %v1079 = vadd.f32 %v807, %v1078
    %v1080 = vpop.f32.mrb[0].mxu0
    %1081 = vmatprep.mubr.bf16.mxu0 0
    %1082 = vmatmul.mubr.bf16.gmra.mrb[0].mxu0 %v1000
    %v1083 = vpop.f32.mrb[0].mxu0
    %v1084 = vadd.f32 %v807, %v1083
    %v1085 = vpop.f32.mrb[0].mxu0
    %v1086 = vpop.f32.mrb[0].mxu0
    %v1087 = vadd.f32 %v807, %v1086
    %v1088 = vpop.f32.mrb[0].mxu0
    %1089 = vmatprep.mubr.bf16.mxu0 0
    %1090 = vmatmul.mubr.bf16.gmra.mrb[0].mxu0 %v1003
    %v1091 = vpop.f32.mrb[0].mxu0
    %v1092 = vadd.f32 %v807, %v1091
    %v1093 = vpop.f32.mrb[0].mxu0
    %v1094 = vpop.f32.mrb[0].mxu0
    %v1095 = vadd.f32 %v807, %v1094
    %v1096 = vpop.f32.mrb[0].mxu0
    %1097 = vmatprep.mubr.bf16.mxu0 0
    %1098 = vmatmul.mubr.bf16.gmra.mrb[0].mxu0 %v1006
    %v1099 = vpop.f32.mrb[0].mxu0
    %v1100 = vadd.f32 %v807, %v1099
    %v1101 = vpop.f32.mrb[0].mxu0
    %v1102 = vpop.f32.mrb[0].mxu0
    %v1103 = vadd.f32 %v807, %v1102
    %v1104 = vpop.f32.mrb[0].mxu0
    %1105 = vmatprep.mubr.bf16.mxu0 0
    %1106 = vmatmul.mubr.bf16.gmra.mrb[0].mxu0 %v1009
    %v1107 = vpop.f32.mrb[0].mxu0
    %v1108 = vadd.f32 %v807, %v1107
    %v1109 = vpop.f32.mrb[0].mxu0
    %v1110 = vpop.f32.mrb[0].mxu0
    %v1111 = vadd.f32 %v807, %v1110
    %v1112 = vpop.f32.mrb[0].mxu0
    %1113 = vmatprep.mubr.bf16.mxu0 0
    %1114 = vmatmul.mubr.bf16.gmra.mrb[0].mxu0 %v1012
    %v1115 = vpop.f32.mrb[0].mxu0
    %v1116 = vadd.f32 %v807, %v1115
    %v1117 = vpop.f32.mrb[0].mxu0
    %v1118 = vpop.f32.mrb[0].mxu0
    %v1119 = vadd.f32 %v807, %v1118
    %v1120 = vpop.f32.mrb[0].mxu0
    %1121 = vmatprep.mubr.bf16.mxu0 0
    %1122 = vmatmul.mubr.bf16.gmra.mrb[0].mxu0 %v1015
    %v1123 = vpop.f32.mrb[0].mxu0
    %v1124 = vadd.f32 %v807, %v1123
    %v1125 = vpop.f32.mrb[0].mxu0
    %v1126 = vpop.f32.mrb[0].mxu0
    %v1127 = vpop.f32.mrb[0].mxu0
    %1128 = vdwg.mxu0
    %v1129 = vmax.f32 %v910, %v1052
    %v1130 = vmax.f32 %v913, %v1055
    %v1131 = vmax.f32 %v918, %v1060
    %v1132 = vmax.f32 %v921, %v1063
    %v1133 = vmax.f32 %v926, %v1068
    %v1134 = vmax.f32 %v929, %v1071
    %v1135 = vmax.f32 %v934, %v1076
    %v1136 = vmax.f32 %v937, %v1079
    %v1137 = vmax.f32 %v942, %v1084
    %v1138 = vmax.f32 %v945, %v1087
    %v1139 = vmax.f32 %v950, %v1092
    %v1140 = vmax.f32 %v953, %v1095
    %v1141 = vmax.f32 %v958, %v1100
    %v1142 = vmax.f32 %v961, %v1103
    %v1143 = vmax.f32 %v966, %v1108
    %v1144 = vmax.f32 %v969, %v1111
    %v1145 = vmax.f32 %v974, %v1116
    %v1146 = vmax.f32 %v977, %v1119
    %v1147 = vmax.f32 %v982, %v1124
    %v1148 = vmax.f32 %v1129, 0.0
    %v1149 = vmax.f32 %v1130, 0.0
    %v1150 = vmax.f32 %v1131, 0.0
    %v1151 = vmax.f32 %v1132, 0.0
    %v1152 = vmax.f32 %v1133, 0.0
    %v1153 = vmax.f32 %v1134, 0.0
    %v1154 = vmax.f32 %v1135, 0.0
    %v1155 = vmax.f32 %v1136, 0.0
    %v1156 = vmax.f32 %v1137, 0.0
    %v1157 = vmax.f32 %v1138, 0.0
    %v1158 = vmax.f32 %v1139, 0.0
    %v1159 = vmax.f32 %v1140, 0.0
    %v1160 = vmax.f32 %v1141, 0.0
    %v1161 = vmax.f32 %v1142, 0.0
    %v1162 = vmax.f32 %v1143, 0.0
    %v1163 = vmax.f32 %v1144, 0.0
    %v1164 = vmax.f32 %v1145, 0.0
    %v1165 = vmax.f32 %v1146, 0.0
    %v1166 = vmax.f32 %v1147, 0.0
    %vm1167 = vcmask 122880
    %1168 = vst.msk [vmem:[#allocation3] sm:$0x1] %vm1167, 0.0
    %vm1169 = vcmask 385280
    %1170 = vst.msk [vmem:[#allocation3 + $0x49] sm:$0x1] %vm1169, 0.0
    %vm1171 = vcmask 130048
    %1172 = vst.msk [vmem:[#allocation3 + $0x1] sm:$0xff] %vm1171, %v1148
    %1173 = vst.msk [vmem:[#allocation3 + $0x9] sm:$0xff] %vm1171, %v1149
    %1174 = vst.msk [vmem:[#allocation3 + $0x11] sm:$0xff] %vm1171, %v1150
    %1175 = vst.msk [vmem:[#allocation3 + $0x19] sm:$0xff] %vm1171, %v1151
    %1176 = vst.msk [vmem:[#allocation3 + $0x21] sm:$0xff] %vm1171, %v1152
    %1177 = vst.msk [vmem:[#allocation3 + $0x29] sm:$0xff] %vm1171, %v1153
    %1178 = vst.msk [vmem:[#allocation3 + $0x31] sm:$0xff] %vm1171, %v1154
    %1179 = vst.msk [vmem:[#allocation3 + $0x39] sm:$0xff] %vm1171, %v1155
    %1180 = vst.msk [vmem:[#allocation3 + $0x41] sm:$0xff] %vm1171, %v1156
    %1181 = vst.msk [vmem:[#allocation3 + $0x49] sm:$0x1] %vm1167, %v1157
    %1192 = vrot.lane.b32.xlu0 %v1148, 16
    %v1193 = vpop.permute.xlu0 %1192
    %1194 = vrot.lane.b32.xlu0 %v1149, 16
    %v1195 = vpop.permute.xlu0 %1194
    %1196 = vrot.lane.b32.xlu0 %v1150, 16
    %v1197 = vpop.permute.xlu0 %1196
    %1198 = vrot.lane.b32.xlu0 %v1151, 16
    %v1199 = vpop.permute.xlu0 %1198
    %1200 = vrot.lane.b32.xlu0 %v1152, 16
    %v1201 = vpop.permute.xlu0 %1200
    %1202 = vrot.lane.b32.xlu0 %v1153, 16
    %v1203 = vpop.permute.xlu0 %1202
    %1204 = vrot.lane.b32.xlu0 %v1154, 16
    %v1205 = vpop.permute.xlu0 %1204
    %1206 = vrot.lane.b32.xlu0 %v1155, 16
    %v1207 = vpop.permute.xlu0 %1206
    %1208 = vrot.lane.b32.xlu0 %v1156, 16
    %v1209 = vpop.permute.xlu0 %1208
    %1210 = vrot.lane.b32.xlu0 %v1157, 16
    %v1211 = vpop.permute.xlu0 %1210
    %vm1222 = vcmask 261248
    %1223 = vst.msk [vmem:[#allocation3] sm:$0xff] %vm1222, %v1193
    %1224 = vst.msk [vmem:[#allocation3 + $0x8] sm:$0xff] %vm1222, %v1195
    %1225 = vst.msk [vmem:[#allocation3 + $0x10] sm:$0xff] %vm1222, %v1197
    %1226 = vst.msk [vmem:[#allocation3 + $0x18] sm:$0xff] %vm1222, %v1199
    %1227 = vst.msk [vmem:[#allocation3 + $0x20] sm:$0xff] %vm1222, %v1201
    %1228 = vst.msk [vmem:[#allocation3 + $0x28] sm:$0xff] %vm1222, %v1203
    %1229 = vst.msk [vmem:[#allocation3 + $0x30] sm:$0xff] %vm1222, %v1205
    %1230 = vst.msk [vmem:[#allocation3 + $0x38] sm:$0xff] %vm1222, %v1207
    %1231 = vst.msk [vmem:[#allocation3 + $0x40] sm:$0xff] %vm1222, %v1209
    %vm1232 = vcmask 255104
    %1233 = vst.msk [vmem:[#allocation3 + $0x48] sm:$0x3] %vm1232, %v1211
    %1234 = vrot.lane.b32.xlu0 %v1148, 32
    %v1235 = vpop.permute.xlu0 %1234
    %1236 = vrot.lane.b32.xlu0 %v1149, 32
    %v1237 = vpop.permute.xlu0 %1236
    %1238 = vrot.lane.b32.xlu0 %v1150, 32
    %v1239 = vpop.permute.xlu0 %1238
    %1240 = vrot.lane.b32.xlu0 %v1151, 32
    %v1241 = vpop.permute.xlu0 %1240
    %1242 = vrot.lane.b32.xlu0 %v1152, 32
    %v1243 = vpop.permute.xlu0 %1242
    %1244 = vrot.lane.b32.xlu0 %v1153, 32
    %v1245 = vpop.permute.xlu0 %1244
    %1246 = vrot.lane.b32.xlu0 %v1154, 32
    %v1247 = vpop.permute.xlu0 %1246
    %1248 = vrot.lane.b32.xlu0 %v1155, 32
    %v1249 = vpop.permute.xlu0 %1248
    %1250 = vrot.lane.b32.xlu0 %v1156, 32
    %v1251 = vpop.permute.xlu0 %1250
    %1252 = vrot.lane.b32.xlu0 %v1157, 32
    %v1253 = vpop.permute.xlu0 %1252
    %vm1264 = vcmask 392449
    %1265 = vst.msk [vmem:[#allocation3 - $0x1] sm:$0xfe] %vm1264, %v1235
    %vm1266 = vcmask 392448
    %1267 = vst.msk [vmem:[#allocation3 + $0x7] sm:$0xff] %vm1266, %v1237
    %1268 = vst.msk [vmem:[#allocation3 + $0xf] sm:$0xff] %vm1266, %v1239
    %1269 = vst.msk [vmem:[#allocation3 + $0x17] sm:$0xff] %vm1266, %v1241
    %1270 = vst.msk [vmem:[#allocation3 + $0x1f] sm:$0xff] %vm1266, %v1243
    %1271 = vst.msk [vmem:[#allocation3 + $0x27] sm:$0xff] %vm1266, %v1245
    %1272 = vst.msk [vmem:[#allocation3 + $0x2f] sm:$0xff] %vm1266, %v1247
    %1273 = vst.msk [vmem:[#allocation3 + $0x37] sm:$0xff] %vm1266, %v1249
    %1274 = vst.msk [vmem:[#allocation3 + $0x3f] sm:$0xff] %vm1266, %v1251
    %vm1275 = vcmask 386304
    %1276 = vst.msk [vmem:[#allocation3 + $0x47] sm:$0x3] %vm1275, %v1253
    %1277 = vst.msk [vmem:[#allocation3 + $0x4a] sm:$0x1] %vm1167, 0.0
    %1278 = vst.msk [vmem:[#allocation3 + $0x93] sm:$0x1] %vm1169, 0.0
    %vm1279 = vcmask 130050
    %1280 = vst.msk [vmem:[#allocation3 + $0x49] sm:$0xfc] %vm1279, %v1157
    %1281 = vst.msk [vmem:[#allocation3 + $0x51] sm:$0xff] %vm1171, %v1158
    %1282 = vst.msk [vmem:[#allocation3 + $0x59] sm:$0xff] %vm1171, %v1159
    %1283 = vst.msk [vmem:[#allocation3 + $0x61] sm:$0xff] %vm1171, %v1160
    %1284 = vst.msk [vmem:[#allocation3 + $0x69] sm:$0xff] %vm1171, %v1161
    %1285 = vst.msk [vmem:[#allocation3 + $0x71] sm:$0xff] %vm1171, %v1162
    %1286 = vst.msk [vmem:[#allocation3 + $0x79] sm:$0xff] %vm1171, %v1163
    %1287 = vst.msk [vmem:[#allocation3 + $0x81] sm:$0xff] %vm1171, %v1164
    %1288 = vst.msk [vmem:[#allocation3 + $0x89] sm:$0xff] %vm1171, %v1165
    %vm1289 = vcmask 124928
    %1290 = vst.msk [vmem:[#allocation3 + $0x91] sm:$0x7] %vm1289, %v1166
    %1300 = vrot.lane.b32.xlu0 %v1158, 16
    %v1301 = vpop.permute.xlu0 %1300
    %1302 = vrot.lane.b32.xlu0 %v1159, 16
    %v1303 = vpop.permute.xlu0 %1302
    %1304 = vrot.lane.b32.xlu0 %v1160, 16
    %v1305 = vpop.permute.xlu0 %1304
    %1306 = vrot.lane.b32.xlu0 %v1161, 16
    %v1307 = vpop.permute.xlu0 %1306
    %1308 = vrot.lane.b32.xlu0 %v1162, 16
    %v1309 = vpop.permute.xlu0 %1308
    %1310 = vrot.lane.b32.xlu0 %v1163, 16
    %v1311 = vpop.permute.xlu0 %1310
    %1312 = vrot.lane.b32.xlu0 %v1164, 16
    %v1313 = vpop.permute.xlu0 %1312
    %1314 = vrot.lane.b32.xlu0 %v1165, 16
    %v1315 = vpop.permute.xlu0 %1314
    %1316 = vrot.lane.b32.xlu0 %v1166, 16
    %v1317 = vpop.permute.xlu0 %1316
    %vm1327 = vcmask 261250
    %1328 = vst.msk [vmem:[#allocation3 + $0x48] sm:$0xfc] %vm1327, %v1211
    %1329 = vst.msk [vmem:[#allocation3 + $0x50] sm:$0xff] %vm1222, %v1301
    %1330 = vst.msk [vmem:[#allocation3 + $0x58] sm:$0xff] %vm1222, %v1303
    %1331 = vst.msk [vmem:[#allocation3 + $0x60] sm:$0xff] %vm1222, %v1305
    %1332 = vst.msk [vmem:[#allocation3 + $0x68] sm:$0xff] %vm1222, %v1307
    %1333 = vst.msk [vmem:[#allocation3 + $0x70] sm:$0xff] %vm1222, %v1309
    %1334 = vst.msk [vmem:[#allocation3 + $0x78] sm:$0xff] %vm1222, %v1311
    %1335 = vst.msk [vmem:[#allocation3 + $0x80] sm:$0xff] %vm1222, %v1313
    %1336 = vst.msk [vmem:[#allocation3 + $0x88] sm:$0xff] %vm1222, %v1315
    %vm1337 = vcmask 257152
    %1338 = vst.msk [vmem:[#allocation3 + $0x90] sm:$0xf] %vm1337, %v1317
    %1339 = vrot.lane.b32.xlu0 %v1158, 32
    %v1340 = vpop.permute.xlu0 %1339
    %1341 = vrot.lane.b32.xlu0 %v1159, 32
    %v1342 = vpop.permute.xlu0 %1341
    %1343 = vrot.lane.b32.xlu0 %v1160, 32
    %v1344 = vpop.permute.xlu0 %1343
    %1345 = vrot.lane.b32.xlu0 %v1161, 32
    %v1346 = vpop.permute.xlu0 %1345
    %1347 = vrot.lane.b32.xlu0 %v1162, 32
    %v1348 = vpop.permute.xlu0 %1347
    %1349 = vrot.lane.b32.xlu0 %v1163, 32
    %v1350 = vpop.permute.xlu0 %1349
    %1351 = vrot.lane.b32.xlu0 %v1164, 32
    %v1352 = vpop.permute.xlu0 %1351
    %1353 = vrot.lane.b32.xlu0 %v1165, 32
    %v1354 = vpop.permute.xlu0 %1353
    %1355 = vrot.lane.b32.xlu0 %v1166, 32
    %v1356 = vpop.permute.xlu0 %1355
    %vm1366 = vcmask 392451
    %1367 = vst.msk [vmem:[#allocation3 + $0x47] sm:$0xf8] %vm1366, %v1253
    %1368 = vst.msk [vmem:[#allocation3 + $0x4f] sm:$0xff] %vm1266, %v1340
    %1369 = vst.msk [vmem:[#allocation3 + $0x57] sm:$0xff] %vm1266, %v1342
    %1370 = vst.msk [vmem:[#allocation3 + $0x5f] sm:$0xff] %vm1266, %v1344
    %1371 = vst.msk [vmem:[#allocation3 + $0x67] sm:$0xff] %vm1266, %v1346
    %1372 = vst.msk [vmem:[#allocation3 + $0x6f] sm:$0xff] %vm1266, %v1348
    %1373 = vst.msk [vmem:[#allocation3 + $0x77] sm:$0xff] %vm1266, %v1350
    %1374 = vst.msk [vmem:[#allocation3 + $0x7f] sm:$0xff] %vm1266, %v1352
    %1375 = vst.msk [vmem:[#allocation3 + $0x87] sm:$0xff] %vm1266, %v1354
    %vm1376 = vcmask 388352
    %1377 = vst.msk [vmem:[#allocation3 + $0x8f] sm:$0xf] %vm1376, %v1356
    %v1378 = vld [vmem:[#allocation3] ss:$2 sm:$0xff]
    %s1379 = scalar_lea.vmem [#allocation3], 16
    %v1380 = vld [vmem:[%s1379] ss:$2 sm:$0xff]
    %s1381 = scalar_lea.vmem [#allocation3], 32
    %v1382 = vld [vmem:[%s1381] ss:$2 sm:$0xff]
    %s1383 = scalar_lea.vmem [#allocation3], 48
    %v1384 = vld [vmem:[%s1383] ss:$2 sm:$0xff]
    %s1385 = scalar_lea.vmem [#allocation3], 64
    %v1386 = vld [vmem:[%s1385] ss:$2 sm:$0xff]
    %s1387 = scalar_lea.vmem [#allocation3], 80
    %v1388 = vld [vmem:[%s1387] ss:$2 sm:$0xff]
    %s1389 = scalar_lea.vmem [#allocation3], 96
    %v1390 = vld [vmem:[%s1389] ss:$2 sm:$0xff]
    %s1391 = scalar_lea.vmem [#allocation3], 112
    %v1392 = vld [vmem:[%s1391] ss:$2 sm:$0xff]
    %s1393 = scalar_lea.vmem [#allocation3], 128
    %v1394 = vld [vmem:[%s1393] ss:$2 sm:$0xff]
    %s1395 = scalar_lea.vmem [#allocation3], 144
    %v1396 = vld [vmem:[%s1395] ss:$2 sm:$0x3]
    %v1397 = vpack.c.bf16 %v1380, %v1378
    %v1398 = vpack.c.bf16 %v1384, %v1382
    %v1399 = vpack.c.bf16 %v1388, %v1386
    %v1400 = vpack.c.bf16 %v1392, %v1390
    %v1401 = vpack.c.bf16 %v1396, %v1394
    %s1402 = scalar_lea.vmem [#allocation3], 1
    %v1403 = vld [vmem:[%s1402] ss:$2 sm:$0xff]
    %s1404 = scalar_lea.vmem [#allocation3], 17
    %v1405 = vld [vmem:[%s1404] ss:$2 sm:$0xff]
    %s1406 = scalar_lea.vmem [#allocation3], 33
    %v1407 = vld [vmem:[%s1406] ss:$2 sm:$0xff]
    %s1408 = scalar_lea.vmem [#allocation3], 49
    %v1409 = vld [vmem:[%s1408] ss:$2 sm:$0xff]
    %s1410 = scalar_lea.vmem [#allocation3], 65
    %v1411 = vld [vmem:[%s1410] ss:$2 sm:$0xff]
    %s1412 = scalar_lea.vmem [#allocation3], 81
    %v1413 = vld [vmem:[%s1412] ss:$2 sm:$0xff]
    %s1414 = scalar_lea.vmem [#allocation3], 97
    %v1415 = vld [vmem:[%s1414] ss:$2 sm:$0xff]
    %s1416 = scalar_lea.vmem [#allocation3], 113
    %v1417 = vld [vmem:[%s1416] ss:$2 sm:$0xff]
    %s1418 = scalar_lea.vmem [#allocation3], 129
    %v1419 = vld [vmem:[%s1418] ss:$2 sm:$0xff]
    %s1420 = scalar_lea.vmem [#allocation3], 145
    %v1421 = vld [vmem:[%s1420] ss:$2 sm:$0x3]
    %v1422 = vpack.c.bf16 %v1405, %v1403
    %v1423 = vpack.c.bf16 %v1409, %v1407
    %v1424 = vpack.c.bf16 %v1413, %v1411
    %v1425 = vpack.c.bf16 %v1417, %v1415
    %v1426 = vpack.c.bf16 %v1421, %v1419
    %v1427 = vld [vmem:[%s2] sm:$0xf]
    %v1428 = vld [vmem:[%s2 + $0x4] sm:$0xf]
    %v1429 = vld [vmem:[%s2 + $0x8] sm:$0xf]
    %v1430 = vld [vmem:[%s2 + $0xc] sm:$0xf]
    %v1431 = vld [vmem:[%s2 + $0x10] sm:$0xf]
    %v1432 = vld [vmem:[%s2 + $0x14] sm:$0xf]
    %v1433 = vlaneseq
    %v1434 = vshrl.u32 %v1433, 7
    %v1435 = vsub.s32 0, %v1434
    %v1436 = vrot.slane %v32, %v1435
    %v1443 = vunpack.c.l.b16 %v1427
    %v1444 = vunpack.c.l.b16 %v1428
    %v1445 = vunpack.c.l.b16 %v1429
    %v1446 = vunpack.c.l.b16 %v1430
    %v1447 = vunpack.c.l.b16 %v1431
    %v1448 = vunpack.c.l.b16 %v1432
    %v1449 = vpack.c.b16 %v1444, %v1443
    %v1450 = vpack.c.b16 %v1446, %v1445
    %v1451 = vpack.c.b16 %v1448, %v1447
    %vm1455 = vcmask 392192
    %v1457 = vsel %vm1455, %v1397, 0
    %v1460 = vsel %vm1455, %v1398, 0
    %v1463 = vsel %vm1455, %v1399, 0
    %v1466 = vsel %vm1455, %v1400, 0
    %v1469 = vsel %vm1455, %v1401, 0
    %1471 = vmatprep.subr.bf16.mxu0 0
    %1472 = vmatpush1.bf16.msra.mxu0 %v1449
    %1473 = vmatprep.subr.bf16.mxu0 0
    %1474 = vmatpush1.bf16.msra.mxu0 %v1450
    %1475 = vmatprep.subr.bf16.mxu0 0
    %1476 = vmatpush1.bf16.msra.mxu0 %v1451
    %1477 = vmatprep.subr.bf16.mxu0 0
    %1478 = vmatpush1.bf16.msra.mxu0 0
    %1479 = vmatprep.subr.bf16.mxu0 0
    %1480 = vmatpush1.bf16.msra.mxu0 0
    %1481 = vmatprep.subr.bf16.mxu0 0
    %1482 = vmatpush1.bf16.msra.mxu0 0
    %1483 = vmatprep.subr.bf16.mxu0 0
    %1484 = vmatpush1.bf16.msra.mxu0 0
    %1485 = vmatprep.subr.bf16.mxu0 0
    %1486 = vmatpush1.bf16.msra.mxu0 0
    %1487 = vmatprep.subr.bf16.mxu0 0
    %1488 = vmatpush1.bf16.msra.mxu0 0
    %1489 = vmatprep.subr.bf16.mxu0 0
    %1490 = vmatpush1.bf16.msra.mxu0 0
    %1491 = vmatprep.subr.bf16.mxu0 0
    %1492 = vmatpush1.bf16.msra.mxu0 0
    %1493 = vmatprep.subr.bf16.mxu0 0
    %1494 = vmatpush1.bf16.msra.mxu0 0
    %1495 = vmatprep.subr.bf16.mxu0 0
    %1496 = vmatpush1.bf16.msra.mxu0 0
    %1497 = vmatprep.subr.bf16.mxu0 0
    %1498 = vmatpush1.bf16.msra.mxu0 0
    %1499 = vmatprep.subr.bf16.mxu0 0
    %1500 = vmatpush1.bf16.msra.mxu0 0
    %1501 = vmatprep.subr.bf16.mxu0 0
    %1502 = vmatpush1.bf16.msra.mxu0 0
    %1503 = vmatprep.mubr.bf16.mxu0 0
    %1504 = vmatmul.mubr.bf16.gmra.mrb[0].mxu0 %v1457
    %v1505 = vpop.f32.mrb[0].mxu0
    %v1506 = vadd.f32 %v1436, %v1505
    %v1507 = vpop.f32.mrb[0].mxu0
    %v1508 = vpop.f32.mrb[0].mxu0
    %v1509 = vadd.f32 %v1436, %v1508
    %v1510 = vpop.f32.mrb[0].mxu0
    %1511 = vmatprep.mubr.bf16.mxu0 0
    %1512 = vmatmul.mubr.bf16.gmra.mrb[0].mxu0 %v1460
    %v1513 = vpop.f32.mrb[0].mxu0
    %v1514 = vadd.f32 %v1436, %v1513
    %v1515 = vpop.f32.mrb[0].mxu0
    %v1516 = vpop.f32.mrb[0].mxu0
    %v1517 = vadd.f32 %v1436, %v1516
    %v1518 = vpop.f32.mrb[0].mxu0
    %1519 = vmatprep.mubr.bf16.mxu0 0
    %1520 = vmatmul.mubr.bf16.gmra.mrb[0].mxu0 %v1463
    %v1521 = vpop.f32.mrb[0].mxu0
    %v1522 = vadd.f32 %v1436, %v1521
    %v1523 = vpop.f32.mrb[0].mxu0
    %v1524 = vpop.f32.mrb[0].mxu0
    %v1525 = vadd.f32 %v1436, %v1524
    %v1526 = vpop.f32.mrb[0].mxu0
    %1527 = vmatprep.mubr.bf16.mxu0 0
    %1528 = vmatmul.mubr.bf16.gmra.mrb[0].mxu0 %v1466
    %v1529 = vpop.f32.mrb[0].mxu0
    %v1530 = vadd.f32 %v1436, %v1529
    %v1531 = vpop.f32.mrb[0].mxu0
    %v1532 = vpop.f32.mrb[0].mxu0
    %v1533 = vadd.f32 %v1436, %v1532
    %v1534 = vpop.f32.mrb[0].mxu0
    %1535 = vmatprep.mubr.bf16.mxu0 0
    %1536 = vmatmul.mubr.bf16.gmra.mrb[0].mxu0 %v1469
    %v1537 = vpop.f32.mrb[0].mxu0
    %v1538 = vadd.f32 %v1436, %v1537
    %v1539 = vpop.f32.mrb[0].mxu0
    %v1540 = vpop.f32.mrb[0].mxu0
    %v1541 = vadd.f32 %v1436, %v1540
    %v1542 = vpop.f32.mrb[0].mxu0
    %1543 = vdwg.mxu0
    %v1545 = vsel %vm1455, %v1422, 0
    %v1548 = vsel %vm1455, %v1423, 0
    %v1551 = vsel %vm1455, %v1424, 0
    %v1554 = vsel %vm1455, %v1425, 0
    %v1557 = vsel %vm1455, %v1426, 0
    %1559 = vmatprep.subr.bf16.mxu0 0
    %1560 = vmatpush1.bf16.msra.mxu0 %v1449
    %1561 = vmatprep.subr.bf16.mxu0 0
    %1562 = vmatpush1.bf16.msra.mxu0 %v1450
    %1563 = vmatprep.subr.bf16.mxu0 0
    %1564 = vmatpush1.bf16.msra.mxu0 %v1451
    %1565 = vmatprep.subr.bf16.mxu0 0
    %1566 = vmatpush1.bf16.msra.mxu0 0
    %1567 = vmatprep.subr.bf16.mxu0 0
    %1568 = vmatpush1.bf16.msra.mxu0 0
    %1569 = vmatprep.subr.bf16.mxu0 0
    %1570 = vmatpush1.bf16.msra.mxu0 0
    %1571 = vmatprep.subr.bf16.mxu0 0
    %1572 = vmatpush1.bf16.msra.mxu0 0
    %1573 = vmatprep.subr.bf16.mxu0 0
    %1574 = vmatpush1.bf16.msra.mxu0 0
    %1575 = vmatprep.subr.bf16.mxu0 0
    %1576 = vmatpush1.bf16.msra.mxu0 0
    %1577 = vmatprep.subr.bf16.mxu0 0
    %1578 = vmatpush1.bf16.msra.mxu0 0
    %1579 = vmatprep.subr.bf16.mxu0 0
    %1580 = vmatpush1.bf16.msra.mxu0 0
    %1581 = vmatprep.subr.bf16.mxu0 0
    %1582 = vmatpush1.bf16.msra.mxu0 0
    %1583 = vmatprep.subr.bf16.mxu0 0
    %1584 = vmatpush1.bf16.msra.mxu0 0
    %1585 = vmatprep.subr.bf16.mxu0 0
    %1586 = vmatpush1.bf16.msra.mxu0 0
    %1587 = vmatprep.subr.bf16.mxu0 0
    %1588 = vmatpush1.bf16.msra.mxu0 0
    %1589 = vmatprep.subr.bf16.mxu0 0
    %1590 = vmatpush1.bf16.msra.mxu0 0
    %1591 = vmatprep.mubr.bf16.mxu0 0
    %1592 = vmatmul.mubr.bf16.gmra.mrb[0].mxu0 %v1545
    %v1593 = vpop.f32.mrb[0].mxu0
    %v1594 = vadd.f32 %v1436, %v1593
    %v1595 = vpop.f32.mrb[0].mxu0
    %v1596 = vpop.f32.mrb[0].mxu0
    %v1597 = vadd.f32 %v1436, %v1596
    %v1598 = vpop.f32.mrb[0].mxu0
    %1599 = vmatprep.mubr.bf16.mxu0 0
    %1600 = vmatmul.mubr.bf16.gmra.mrb[0].mxu0 %v1548
    %v1601 = vpop.f32.mrb[0].mxu0
    %v1602 = vadd.f32 %v1436, %v1601
    %v1603 = vpop.f32.mrb[0].mxu0
    %v1604 = vpop.f32.mrb[0].mxu0
    %v1605 = vadd.f32 %v1436, %v1604
    %v1606 = vpop.f32.mrb[0].mxu0
    %1607 = vmatprep.mubr.bf16.mxu0 0
    %1608 = vmatmul.mubr.bf16.gmra.mrb[0].mxu0 %v1551
    %v1609 = vpop.f32.mrb[0].mxu0
    %v1610 = vadd.f32 %v1436, %v1609
    %v1611 = vpop.f32.mrb[0].mxu0
    %v1612 = vpop.f32.mrb[0].mxu0
    %v1613 = vadd.f32 %v1436, %v1612
    %v1614 = vpop.f32.mrb[0].mxu0
    %1615 = vmatprep.mubr.bf16.mxu0 0
    %1616 = vmatmul.mubr.bf16.gmra.mrb[0].mxu0 %v1554
    %v1617 = vpop.f32.mrb[0].mxu0
    %v1618 = vadd.f32 %v1436, %v1617
    %v1619 = vpop.f32.mrb[0].mxu0
    %v1620 = vpop.f32.mrb[0].mxu0
    %v1621 = vadd.f32 %v1436, %v1620
    %v1622 = vpop.f32.mrb[0].mxu0
    %1623 = vmatprep.mubr.bf16.mxu0 0
    %1624 = vmatmul.mubr.bf16.gmra.mrb[0].mxu0 %v1557
    %v1625 = vpop.f32.mrb[0].mxu0
    %v1626 = vadd.f32 %v1436, %v1625
    %v1627 = vpop.f32.mrb[0].mxu0
    %v1628 = vpop.f32.mrb[0].mxu0
    %v1629 = vadd.f32 %v1436, %v1628
    %v1630 = vpop.f32.mrb[0].mxu0
    %1631 = vdwg.mxu0
    %v1632 = vmax.f32 %v1506, %v1594
    %v1633 = vmax.f32 %v1509, %v1597
    %v1634 = vmax.f32 %v1514, %v1602
    %v1635 = vmax.f32 %v1517, %v1605
    %v1636 = vmax.f32 %v1522, %v1610
    %v1637 = vmax.f32 %v1525, %v1613
    %v1638 = vmax.f32 %v1530, %v1618
    %v1639 = vmax.f32 %v1533, %v1621
    %v1640 = vmax.f32 %v1538, %v1626
    %v1641 = vmax.f32 %v1541, %v1629
    %v1642 = vmax.f32 %v1632, 0.0
    %v1643 = vmax.f32 %v1633, 0.0
    %v1644 = vmax.f32 %v1634, 0.0
    %v1645 = vmax.f32 %v1635, 0.0
    %v1646 = vmax.f32 %v1636, 0.0
    %v1647 = vmax.f32 %v1637, 0.0
    %v1648 = vmax.f32 %v1638, 0.0
    %v1649 = vmax.f32 %v1639, 0.0
    %v1650 = vmax.f32 %v1640, 0.0
    %v1651 = vmax.f32 %v1641, 0.0
    %v1652 = vpack.c.bf16 %v1643, %v1642
    %v1653 = vpack.c.bf16 %v1645, %v1644
    %v1654 = vpack.c.bf16 %v1647, %v1646
    %v1655 = vpack.c.bf16 %v1649, %v1648
    %v1656 = vpack.c.bf16 %v1651, %v1650
    %v1657 = vld [vmem:[%s3] sm:$0xff]
    %v1658 = vld [vmem:[%s3 + $0x8] sm:$0xf]
    %v1659 = vld [vmem:[%s3 + $0xc] sm:$0xff]
    %v1660 = vld [vmem:[%s3 + $0x14] sm:$0xf]
    %v1661 = vld [vmem:[%s3 + $0x18] sm:$0xff]
    %v1662 = vld [vmem:[%s3 + $0x20] sm:$0xf]
    %v1663 = vld [vmem:[%s3 + $0x24] sm:$0xff]
    %v1664 = vld [vmem:[%s3 + $0x2c] sm:$0xf]
    %v1665 = vld [vmem:[%s3 + $0x30] sm:$0xff]
    %v1666 = vld [vmem:[%s3 + $0x38] sm:$0xf]
    %v1667 = vld [vmem:[%s3 + $0x3c] sm:$0x11]
    %v1668 = vld [vmem:[%s3 + $0x44] sm:$0x1]
    %v1677 = vunpack.c.l.b16 %v1657
    %v1678 = vunpack.c.h.b16 %v1657
    %v1679 = vunpack.c.l.b16 %v1658
    %v1680 = vunpack.c.l.b16 %v1659
    %v1681 = vunpack.c.h.b16 %v1659
    %v1682 = vunpack.c.l.b16 %v1660
    %v1683 = vunpack.c.l.b16 %v1661
    %v1684 = vunpack.c.h.b16 %v1661
    %v1685 = vunpack.c.l.b16 %v1662
    %v1686 = vunpack.c.l.b16 %v1663
    %v1687 = vunpack.c.h.b16 %v1663
    %v1688 = vunpack.c.l.b16 %v1664
    %v1689 = vpack.c.b16 %v1680, %v1677
    %v1690 = vpack.c.b16 %v1681, %v1678
    %v1691 = vpack.c.b16 %v1682, %v1679
    %v1692 = vpack.c.b16 %v1686, %v1683
    %v1693 = vpack.c.b16 %v1687, %v1684
    %v1694 = vpack.c.b16 %v1688, %v1685
    %v1702 = vsel %vm79, %v1652, 0
    %v1705 = vsel %vm79, %v1653, 0
    %v1708 = vsel %vm79, %v1654, 0
    %v1711 = vsel %vm79, %v1655, 0
    %v1714 = vsel %vm79, %v1656, 0
    %1716 = vmatprep.subr.bf16.mxu0 %v1690
    %1717 = vmatpush1.bf16.msra.mxu0 %v1689
    %1718 = vmatprep.subr.bf16.mxu0 %v1693
    %1719 = vmatpush1.bf16.msra.mxu0 %v1692
    %1720 = vmatprep.subr.bf16.mxu0 0
    %1721 = vmatpush1.bf16.msra.mxu0 0
    %1722 = vmatprep.subr.bf16.mxu0 0
    %1723 = vmatpush1.bf16.msra.mxu0 0
    %1724 = vmatprep.subr.bf16.mxu0 0
    %1725 = vmatpush1.bf16.msra.mxu0 0
    %1726 = vmatprep.subr.bf16.mxu0 0
    %1727 = vmatpush1.bf16.msra.mxu0 0
    %1728 = vmatprep.subr.bf16.mxu0 0
    %1729 = vmatpush1.bf16.msra.mxu0 0
    %1730 = vmatprep.subr.bf16.mxu0 0
    %1731 = vmatpush1.bf16.msra.mxu0 0
    %1732 = vmatprep.subr.bf16.mxu0 0
    %1733 = vmatpush1.bf16.msra.mxu0 0
    %1734 = vmatprep.subr.bf16.mxu0 0
    %1735 = vmatpush1.bf16.msra.mxu0 0
    %1736 = vmatprep.subr.bf16.mxu0 0
    %1737 = vmatpush1.bf16.msra.mxu0 0
    %1738 = vmatprep.subr.bf16.mxu0 0
    %1739 = vmatpush1.bf16.msra.mxu0 0
    %1740 = vmatprep.subr.bf16.mxu0 0
    %1741 = vmatpush1.bf16.msra.mxu0 0
    %1742 = vmatprep.subr.bf16.mxu0 0
    %1743 = vmatpush1.bf16.msra.mxu0 0
    %1744 = vmatprep.subr.bf16.mxu0 0
    %1745 = vmatpush1.bf16.msra.mxu0 0
    %1746 = vmatprep.subr.bf16.mxu0 0
    %1747 = vmatpush1.bf16.msra.mxu0 0
    %1748 = vmatprep.mubr.bf16.mxu0 0
    %1749 = vmatmul.mubr.bf16.gmra.mrb[0].mxu0 %v1702
    %v1750 = vpop.f32.mrb[0].mxu0
    %v1751 = vadd.f32 0.0, %v1750
    %v1752 = vpop.f32.mrb[0].mxu0
    %v1753 = vadd.f32 0.0, %v1752
    %v1754 = vpop.f32.mrb[0].mxu0
    %v1755 = vadd.f32 0.0, %v1754
    %v1756 = vpop.f32.mrb[0].mxu0
    %v1757 = vadd.f32 0.0, %v1756
    %1758 = vmatprep.mubr.bf16.mxu0 0
    %1759 = vmatmul.mubr.bf16.gmra.mrb[0].mxu0 %v1705
    %v1760 = vpop.f32.mrb[0].mxu0
    %v1761 = vadd.f32 0.0, %v1760
    %v1762 = vpop.f32.mrb[0].mxu0
    %v1763 = vadd.f32 0.0, %v1762
    %v1764 = vpop.f32.mrb[0].mxu0
    %v1765 = vadd.f32 0.0, %v1764
    %v1766 = vpop.f32.mrb[0].mxu0
    %v1767 = vadd.f32 0.0, %v1766
    %1768 = vmatprep.mubr.bf16.mxu0 0
    %1769 = vmatmul.mubr.bf16.gmra.mrb[0].mxu0 %v1708
    %v1770 = vpop.f32.mrb[0].mxu0
    %v1771 = vadd.f32 0.0, %v1770
    %v1772 = vpop.f32.mrb[0].mxu0
    %v1773 = vadd.f32 0.0, %v1772
    %v1774 = vpop.f32.mrb[0].mxu0
    %v1775 = vadd.f32 0.0, %v1774
    %v1776 = vpop.f32.mrb[0].mxu0
    %v1777 = vadd.f32 0.0, %v1776
    %1778 = vmatprep.mubr.bf16.mxu0 0
    %1779 = vmatmul.mubr.bf16.gmra.mrb[0].mxu0 %v1711
    %v1780 = vpop.f32.mrb[0].mxu0
    %v1781 = vadd.f32 0.0, %v1780
    %v1782 = vpop.f32.mrb[0].mxu0
    %v1783 = vadd.f32 0.0, %v1782
    %v1784 = vpop.f32.mrb[0].mxu0
    %v1785 = vadd.f32 0.0, %v1784
    %v1786 = vpop.f32.mrb[0].mxu0
    %v1787 = vadd.f32 0.0, %v1786
    %1788 = vmatprep.mubr.bf16.mxu0 0
    %1789 = vmatmul.mubr.bf16.gmra.mrb[0].mxu0 %v1714
    %v1790 = vpop.f32.mrb[0].mxu0
    %v1791 = vadd.f32 0.0, %v1790
    %v1792 = vpop.f32.mrb[0].mxu0
    %v1793 = vadd.f32 0.0, %v1792
    %v1794 = vpop.f32.mrb[0].mxu0
    %v1795 = vadd.f32 0.0, %v1794
    %v1796 = vpop.f32.mrb[0].mxu0
    %v1797 = vadd.f32 0.0, %v1796
    %1798 = vdwg.mxu0
    %1799 = vmatprep.subr.bf16.mxu0 0
    %1800 = vmatpush1.bf16.msra.mxu0 %v1691
    %1801 = vmatprep.subr.bf16.mxu0 0
    %1802 = vmatpush1.bf16.msra.mxu0 %v1694
    %1803 = vmatprep.subr.bf16.mxu0 0
    %1804 = vmatpush1.bf16.msra.mxu0 0
    %1805 = vmatprep.subr.bf16.mxu0 0
    %1806 = vmatpush1.bf16.msra.mxu0 0
    %1807 = vmatprep.subr.bf16.mxu0 0
    %1808 = vmatpush1.bf16.msra.mxu0 0
    %1809 = vmatprep.subr.bf16.mxu0 0
    %1810 = vmatpush1.bf16.msra.mxu0 0
    %1811 = vmatprep.subr.bf16.mxu0 0
    %1812 = vmatpush1.bf16.msra.mxu0 0
    %1813 = vmatprep.subr.bf16.mxu0 0
    %1814 = vmatpush1.bf16.msra.mxu0 0
    %1815 = vmatprep.subr.bf16.mxu0 0
    %1816 = vmatpush1.bf16.msra.mxu0 0
    %1817 = vmatprep.subr.bf16.mxu0 0
    %1818 = vmatpush1.bf16.msra.mxu0 0
    %1819 = vmatprep.subr.bf16.mxu0 0
    %1820 = vmatpush1.bf16.msra.mxu0 0
    %1821 = vmatprep.subr.bf16.mxu0 0
    %1822 = vmatpush1.bf16.msra.mxu0 0
    %1823 = vmatprep.subr.bf16.mxu0 0
    %1824 = vmatpush1.bf16.msra.mxu0 0
    %1825 = vmatprep.subr.bf16.mxu0 0
    %1826 = vmatpush1.bf16.msra.mxu0 0
    %1827 = vmatprep.subr.bf16.mxu0 0
    %1828 = vmatpush1.bf16.msra.mxu0 0
    %1829 = vmatprep.subr.bf16.mxu0 0
    %1830 = vmatpush1.bf16.msra.mxu0 0
    %1831 = vmatprep.mubr.bf16.mxu0 0
    %1832 = vmatmul.mubr.bf16.gmra.mrb[0].mxu0 %v1702
    %v1833 = vpop.f32.mrb[0].mxu0
    %v1834 = vadd.f32 0.0, %v1833
    %v1835 = vpop.f32.mrb[0].mxu0
    %v1836 = vpop.f32.mrb[0].mxu0
    %v1837 = vadd.f32 0.0, %v1836
    %v1838 = vpop.f32.mrb[0].mxu0
    %1839 = vmatprep.mubr.bf16.mxu0 0
    %1840 = vmatmul.mubr.bf16.gmra.mrb[0].mxu0 %v1705
    %v1841 = vpop.f32.mrb[0].mxu0
    %v1842 = vadd.f32 0.0, %v1841
    %v1843 = vpop.f32.mrb[0].mxu0
    %v1844 = vpop.f32.mrb[0].mxu0
    %v1845 = vadd.f32 0.0, %v1844
    %v1846 = vpop.f32.mrb[0].mxu0
    %1847 = vmatprep.mubr.bf16.mxu0 0
    %1848 = vmatmul.mubr.bf16.gmra.mrb[0].mxu0 %v1708
    %v1849 = vpop.f32.mrb[0].mxu0
    %v1850 = vadd.f32 0.0, %v1849
    %v1851 = vpop.f32.mrb[0].mxu0
    %v1852 = vpop.f32.mrb[0].mxu0
    %v1853 = vadd.f32 0.0, %v1852
    %v1854 = vpop.f32.mrb[0].mxu0
    %1855 = vmatprep.mubr.bf16.mxu0 0
    %1856 = vmatmul.mubr.bf16.gmra.mrb[0].mxu0 %v1711
    %v1857 = vpop.f32.mrb[0].mxu0
    %v1858 = vadd.f32 0.0, %v1857
    %v1859 = vpop.f32.mrb[0].mxu0
    %v1860 = vpop.f32.mrb[0].mxu0
    %v1861 = vadd.f32 0.0, %v1860
    %v1862 = vpop.f32.mrb[0].mxu0
    %1863 = vmatprep.mubr.bf16.mxu0 0
    %1864 = vmatmul.mubr.bf16.gmra.mrb[0].mxu0 %v1714
    %v1865 = vpop.f32.mrb[0].mxu0
    %v1866 = vadd.f32 0.0, %v1865
    %v1867 = vpop.f32.mrb[0].mxu0
    %v1868 = vpop.f32.mrb[0].mxu0
    %v1869 = vadd.f32 0.0, %v1868
    %v1870 = vpop.f32.mrb[0].mxu0
    %1871 = vdwg.mxu0
    %v1872 = vlaneseq
    %v1873 = vshrl.u32 %v1872, 7
    %v1874 = vadd.s32 %v1873, 8
    %v1875 = vadd.s32 %v1873, 16
    %v1876 = vadd.s32 %v1873, 24
    %v1877 = vadd.s32 %v1873, 32
    %v1878 = vadd.s32 %v1873, 40
    %v1879 = vadd.s32 %v1873, 48
    %v1880 = vadd.s32 %v1873, 56
    %v1881 = vadd.s32 %v1873, 64
    %v1882 = vadd.s32 %v1873, 72
    %v1883 = vlaneseq
    %v1884 = vand.u32 %v1883, 127
    %v1885 = vadd.s32 %v1884, 128
    %v1886 = vadd.s32 %v1884, 256
    %vm1887 = vcmp.ge.s32.totalorder %v1873, 37
    %vm1888 = vcmp.ge.s32.totalorder %v1874, 37
    %vm1889 = vcmp.ge.s32.totalorder %v1875, 37
    %vm1890 = vcmp.ge.s32.totalorder %v1876, 37
    %vm1891 = vcmp.ge.s32.totalorder %v1877, 37
    %vm1892 = vcmp.ge.s32.totalorder %v1878, 37
    %vm1893 = vcmp.ge.s32.totalorder %v1879, 37
    %vm1894 = vcmp.ge.s32.totalorder %v1880, 37
    %vm1895 = vcmp.ge.s32.totalorder %v1881, 37
    %vm1896 = vcmp.ge.s32.totalorder %v1882, 37
    %v1897 = vsub.s32 %v1873, 37
    %v1898 = vsub.s32 %v1874, 37
    %v1899 = vsub.s32 %v1875, 37
    %v1900 = vsub.s32 %v1876, 37
    %v1901 = vsub.s32 %v1877, 37
    %v1902 = vsub.s32 %v1878, 37
    %v1903 = vsub.s32 %v1879, 37
    %v1904 = vsub.s32 %v1880, 37
    %v1905 = vsub.s32 %v1881, 37
    %v1906 = vsub.s32 %v1882, 37
    %v1907 = vsel %vm1887, %v1897, %v1873
    %v1908 = vsel %vm1888, %v1898, %v1874
    %v1909 = vsel %vm1889, %v1899, %v1875
    %v1910 = vsel %vm1890, %v1900, %v1876
    %v1911 = vsel %vm1891, %v1901, %v1877
    %v1912 = vsel %vm1892, %v1902, %v1878
    %v1913 = vsel %vm1893, %v1903, %v1879
    %v1914 = vsel %vm1894, %v1904, %v1880
    %v1915 = vsel %vm1895, %v1905, %v1881
    %v1916 = vsel %vm1896, %v1906, %v1882
    %v1917 = vmul.u32 %v1907, 10
    %v1918 = vmul.u32 %v1908, 10
    %v1919 = vmul.u32 %v1909, 10
    %v1920 = vmul.u32 %v1910, 10
    %v1921 = vmul.u32 %v1911, 10
    %v1922 = vmul.u32 %v1912, 10
    %v1923 = vmul.u32 %v1913, 10
    %v1924 = vmul.u32 %v1914, 10
    %v1925 = vmul.u32 %v1915, 10
    %v1926 = vmul.u32 %v1916, 10
    %vm1927 = vcmp.ge.s32.totalorder %v1884, %v1917
    %vm1928 = vcmp.ge.s32.totalorder %v1885, %v1917
    %vm1929 = vcmp.ge.s32.totalorder %v1886, %v1917
    %vm1930 = vcmp.ge.s32.totalorder %v1884, %v1918
    %vm1931 = vcmp.ge.s32.totalorder %v1885, %v1918
    %vm1932 = vcmp.ge.s32.totalorder %v1886, %v1918
    %vm1933 = vcmp.ge.s32.totalorder %v1884, %v1919
    %vm1934 = vcmp.ge.s32.totalorder %v1885, %v1919
    %vm1935 = vcmp.ge.s32.totalorder %v1886, %v1919
    %vm1936 = vcmp.ge.s32.totalorder %v1884, %v1920
    %vm1937 = vcmp.ge.s32.totalorder %v1885, %v1920
    %vm1938 = vcmp.ge.s32.totalorder %v1886, %v1920
    %vm1939 = vcmp.ge.s32.totalorder %v1884, %v1921
    %vm1940 = vcmp.ge.s32.totalorder %v1885, %v1921
    %vm1941 = vcmp.ge.s32.totalorder %v1886, %v1921
    %vm1942 = vcmp.ge.s32.totalorder %v1884, %v1922
    %vm1943 = vcmp.ge.s32.totalorder %v1885, %v1922
    %vm1944 = vcmp.ge.s32.totalorder %v1886, %v1922
    %vm1945 = vcmp.ge.s32.totalorder %v1884, %v1923
    %vm1946 = vcmp.ge.s32.totalorder %v1885, %v1923
    %vm1947 = vcmp.ge.s32.totalorder %v1886, %v1923
    %vm1948 = vcmp.ge.s32.totalorder %v1884, %v1924
    %vm1949 = vcmp.ge.s32.totalorder %v1885, %v1924
    %vm1950 = vcmp.ge.s32.totalorder %v1886, %v1924
    %vm1951 = vcmp.ge.s32.totalorder %v1884, %v1925
    %vm1952 = vcmp.ge.s32.totalorder %v1885, %v1925
    %vm1953 = vcmp.ge.s32.totalorder %v1886, %v1925
    %vm1954 = vcmp.ge.s32.totalorder %v1884, %v1926
    %vm1955 = vcmp.ge.s32.totalorder %v1885, %v1926
    %vm1956 = vcmp.ge.s32.totalorder %v1886, %v1926
    %v1957 = vadd.s32 %v1917, 10
    %v1958 = vadd.s32 %v1918, 10
    %v1959 = vadd.s32 %v1919, 10
    %v1960 = vadd.s32 %v1920, 10
    %v1961 = vadd.s32 %v1921, 10
    %v1962 = vadd.s32 %v1922, 10
    %v1963 = vadd.s32 %v1923, 10
    %v1964 = vadd.s32 %v1924, 10
    %v1965 = vadd.s32 %v1925, 10
    %v1966 = vadd.s32 %v1926, 10
    %vm1967 = vcmp.lt.s32.totalorder %v1884, %v1957
    %vm1968 = vcmp.lt.s32.totalorder %v1885, %v1957
    %vm1969 = vcmp.lt.s32.totalorder %v1886, %v1957
    %vm1970 = vcmp.lt.s32.totalorder %v1884, %v1958
    %vm1971 = vcmp.lt.s32.totalorder %v1885, %v1958
    %vm1972 = vcmp.lt.s32.totalorder %v1886, %v1958
    %vm1973 = vcmp.lt.s32.totalorder %v1884, %v1959
    %vm1974 = vcmp.lt.s32.totalorder %v1885, %v1959
    %vm1975 = vcmp.lt.s32.totalorder %v1886, %v1959
    %vm1976 = vcmp.lt.s32.totalorder %v1884, %v1960
    %vm1977 = vcmp.lt.s32.totalorder %v1885, %v1960
    %vm1978 = vcmp.lt.s32.totalorder %v1886, %v1960
    %vm1979 = vcmp.lt.s32.totalorder %v1884, %v1961
    %vm1980 = vcmp.lt.s32.totalorder %v1885, %v1961
    %vm1981 = vcmp.lt.s32.totalorder %v1886, %v1961
    %vm1982 = vcmp.lt.s32.totalorder %v1884, %v1962
    %vm1983 = vcmp.lt.s32.totalorder %v1885, %v1962
    %vm1984 = vcmp.lt.s32.totalorder %v1886, %v1962
    %vm1985 = vcmp.lt.s32.totalorder %v1884, %v1963
    %vm1986 = vcmp.lt.s32.totalorder %v1885, %v1963
    %vm1987 = vcmp.lt.s32.totalorder %v1886, %v1963
    %vm1988 = vcmp.lt.s32.totalorder %v1884, %v1964
    %vm1989 = vcmp.lt.s32.totalorder %v1885, %v1964
    %vm1990 = vcmp.lt.s32.totalorder %v1886, %v1964
    %vm1991 = vcmp.lt.s32.totalorder %v1884, %v1965
    %vm1992 = vcmp.lt.s32.totalorder %v1885, %v1965
    %vm1993 = vcmp.lt.s32.totalorder %v1886, %v1965
    %vm1994 = vcmp.lt.s32.totalorder %v1884, %v1966
    %vm1995 = vcmp.lt.s32.totalorder %v1885, %v1966
    %vm1996 = vcmp.lt.s32.totalorder %v1886, %v1966
    %vm1997 = vmand %vm1927, %vm1967
    %vm1998 = vmand %vm1928, %vm1968
    %vm1999 = vmand %vm1929, %vm1969
    %vm2000 = vmand %vm1930, %vm1970
    %vm2001 = vmand %vm1931, %vm1971
    %vm2002 = vmand %vm1932, %vm1972
    %vm2003 = vmand %vm1933, %vm1973
    %vm2004 = vmand %vm1934, %vm1974
    %vm2005 = vmand %vm1935, %vm1975
    %vm2006 = vmand %vm1936, %vm1976
    %vm2007 = vmand %vm1937, %vm1977
    %vm2008 = vmand %vm1938, %vm1978
    %vm2009 = vmand %vm1939, %vm1979
    %vm2010 = vmand %vm1940, %vm1980
    %vm2011 = vmand %vm1941, %vm1981
    %vm2012 = vmand %vm1942, %vm1982
    %vm2013 = vmand %vm1943, %vm1983
    %vm2014 = vmand %vm1944, %vm1984
    %vm2015 = vmand %vm1945, %vm1985
    %vm2016 = vmand %vm1946, %vm1986
    %vm2017 = vmand %vm1947, %vm1987
    %vm2018 = vmand %vm1948, %vm1988
    %vm2019 = vmand %vm1949, %vm1989
    %vm2020 = vmand %vm1950, %vm1990
    %vm2021 = vmand %vm1951, %vm1991
    %vm2022 = vmand %vm1952, %vm1992
    %vm2023 = vmand %vm1953, %vm1993
    %vm2024 = vmand %vm1954, %vm1994
    %vm2025 = vmand %vm1955, %vm1995
    %vm2026 = vmand %vm1956, %vm1996
    %v2027 = vsel %vm1997, %v1751, 0.0
    %v2028 = vsel %vm1998, %v1753, 0.0
    %v2029 = vsel %vm1999, %v1834, 0.0
    %v2030 = vsel %vm2000, %v1755, 0.0
    %v2031 = vsel %vm2001, %v1757, 0.0
    %v2032 = vsel %vm2002, %v1837, 0.0
    %v2033 = vsel %vm2003, %v1761, 0.0
    %v2034 = vsel %vm2004, %v1763, 0.0
    %v2035 = vsel %vm2005, %v1842, 0.0
    %v2036 = vsel %vm2006, %v1765, 0.0
    %v2037 = vsel %vm2007, %v1767, 0.0
    %v2038 = vsel %vm2008, %v1845, 0.0
    %v2039 = vsel %vm2009, %v1771, 0.0
    %v2040 = vsel %vm2010, %v1773, 0.0
    %v2041 = vsel %vm2011, %v1850, 0.0
    %v2042 = vsel %vm2012, %v1775, 0.0
    %v2043 = vsel %vm2013, %v1777, 0.0
    %v2044 = vsel %vm2014, %v1853, 0.0
    %v2045 = vsel %vm2015, %v1781, 0.0
    %v2046 = vsel %vm2016, %v1783, 0.0
    %v2047 = vsel %vm2017, %v1858, 0.0
    %v2048 = vsel %vm2018, %v1785, 0.0
    %v2049 = vsel %vm2019, %v1787, 0.0
    %v2050 = vsel %vm2020, %v1861, 0.0
    %v2051 = vsel %vm2021, %v1791, 0.0
    %v2052 = vsel %vm2022, %v1793, 0.0
    %v2053 = vsel %vm2023, %v1866, 0.0
    %v2054 = vsel %vm2024, %v1795, 0.0
    %v2055 = vsel %vm2025, %v1797, 0.0
    %v2056 = vsel %vm2026, %v1869, 0.0
    %v2057 = vpack.c.bf16 %v2030, %v2027
    %v2058 = vpack.c.bf16 %v2031, %v2028
    %v2059 = vpack.c.bf16 %v2032, %v2029
    %v2060 = vpack.c.bf16 %v2036, %v2033
    %v2061 = vpack.c.bf16 %v2037, %v2034
    %v2062 = vpack.c.bf16 %v2038, %v2035
    %v2063 = vpack.c.bf16 %v2042, %v2039
    %v2064 = vpack.c.bf16 %v2043, %v2040
    %v2065 = vpack.c.bf16 %v2044, %v2041
    %v2066 = vpack.c.bf16 %v2048, %v2045
    %v2067 = vpack.c.bf16 %v2049, %v2046
    %v2068 = vpack.c.bf16 %v2050, %v2047
    %v2069 = vpack.c.bf16 %v2054, %v2051
    %v2070 = vpack.c.bf16 %v2055, %v2052
    %v2071 = vpack.c.bf16 %v2056, %v2053
    %v2072 = vmul.u32 %v1873, 37
    %vm2073 = vcmp.ge.s32.totalorder %v1884, %v2072
    %v2074 = vadd.s32 %v1873, 1
    %v2075 = vmul.u32 %v2074, 37
    %vm2076 = vcmp.lt.s32.totalorder %v1884, %v2075
    %vm2077 = vmand %vm2073, %vm2076
    %v2078 = vsel %vm2077, 1, 0
    %v2079 = vcvt.s32.f32 %v2078
    %v2080 = vpack.c.bf16 %v2079, %v2079
    %vm2081 = vcmask 605184
    %v2083 = vsel %vm2081, %v2080, 0
    %vm2085 = vcmask 1044480
    %v2087 = vsel %vm2085, %v2069, 0
    %v2090 = vsel %vm2085, %v2070, 0
    %v2093 = vsel %vm2085, %v2071, 0
    %2095 = vmatprep.subr.bf16.mxu0 %v2058
    %2096 = vmatpush1.bf16.msra.mxu0 %v2057
    %2097 = vmatprep.subr.bf16.mxu0 %v2061
    %2098 = vmatpush1.bf16.msra.mxu0 %v2060
    %2099 = vmatprep.subr.bf16.mxu0 %v2064
    %2100 = vmatpush1.bf16.msra.mxu0 %v2063
    %2101 = vmatprep.subr.bf16.mxu0 %v2067
    %2102 = vmatpush1.bf16.msra.mxu0 %v2066
    %2103 = vmatprep.subr.bf16.mxu0 %v2090
    %2104 = vmatpush1.bf16.msra.mxu0 %v2087
    %2105 = vmatprep.subr.bf16.mxu0 0
    %2106 = vmatpush1.bf16.msra.mxu0 0
    %2107 = vmatprep.subr.bf16.mxu0 0
    %2108 = vmatpush1.bf16.msra.mxu0 0
    %2109 = vmatprep.subr.bf16.mxu0 0
    %2110 = vmatpush1.bf16.msra.mxu0 0
    %2111 = vmatprep.subr.bf16.mxu0 0
    %2112 = vmatpush1.bf16.msra.mxu0 0
    %2113 = vmatprep.subr.bf16.mxu0 0
    %2114 = vmatpush1.bf16.msra.mxu0 0
    %2115 = vmatprep.subr.bf16.mxu0 0
    %2116 = vmatpush1.bf16.msra.mxu0 0
    %2117 = vmatprep.subr.bf16.mxu0 0
    %2118 = vmatpush1.bf16.msra.mxu0 0
    %2119 = vmatprep.subr.bf16.mxu0 0
    %2120 = vmatpush1.bf16.msra.mxu0 0
    %2121 = vmatprep.subr.bf16.mxu0 0
    %2122 = vmatpush1.bf16.msra.mxu0 0
    %2123 = vmatprep.subr.bf16.mxu0 0
    %2124 = vmatpush1.bf16.msra.mxu0 0
    %2125 = vmatprep.subr.bf16.mxu0 0
    %2126 = vmatpush1.bf16.msra.mxu0 0
    %2127 = vmatprep.mubr.bf16.mxu0 0
    %2128 = vmatmul.mubr.bf16.gmra.mrb[0].mxu0 %v2083
    %v2129 = vpop.f32.mrb[0].mxu0
    %v2130 = vadd.f32 0.0, %v2129
    %v2131 = vpop.f32.mrb[0].mxu0
    %v2132 = vadd.f32 0.0, %v2131
    %v2133 = vpop.f32.mrb[0].mxu0
    %v2134 = vpop.f32.mrb[0].mxu0
    %2135 = vdwg.mxu0
    %2136 = vmatprep.subr.bf16.mxu0 0
    %2137 = vmatpush1.bf16.msra.mxu0 %v2059
    %2138 = vmatprep.subr.bf16.mxu0 0
    %2139 = vmatpush1.bf16.msra.mxu0 %v2062
    %2140 = vmatprep.subr.bf16.mxu0 0
    %2141 = vmatpush1.bf16.msra.mxu0 %v2065
    %2142 = vmatprep.subr.bf16.mxu0 0
    %2143 = vmatpush1.bf16.msra.mxu0 %v2068
    %2144 = vmatprep.subr.bf16.mxu0 0
    %2145 = vmatpush1.bf16.msra.mxu0 %v2093
    %2146 = vmatprep.subr.bf16.mxu0 0
    %2147 = vmatpush1.bf16.msra.mxu0 0
    %2148 = vmatprep.subr.bf16.mxu0 0
    %2149 = vmatpush1.bf16.msra.mxu0 0
    %2150 = vmatprep.subr.bf16.mxu0 0
    %2151 = vmatpush1.bf16.msra.mxu0 0
    %2152 = vmatprep.subr.bf16.mxu0 0
    %2153 = vmatpush1.bf16.msra.mxu0 0
    %2154 = vmatprep.subr.bf16.mxu0 0
    %2155 = vmatpush1.bf16.msra.mxu0 0
    %2156 = vmatprep.subr.bf16.mxu0 0
    %2157 = vmatpush1.bf16.msra.mxu0 0
    %2158 = vmatprep.subr.bf16.mxu0 0
    %2159 = vmatpush1.bf16.msra.mxu0 0
    %2160 = vmatprep.subr.bf16.mxu0 0
    %2161 = vmatpush1.bf16.msra.mxu0 0
    %2162 = vmatprep.subr.bf16.mxu0 0
    %2163 = vmatpush1.bf16.msra.mxu0 0
    %2164 = vmatprep.subr.bf16.mxu0 0
    %2165 = vmatpush1.bf16.msra.mxu0 0
    %2166 = vmatprep.subr.bf16.mxu0 0
    %2167 = vmatpush1.bf16.msra.mxu0 0
    %2168 = vmatprep.mubr.bf16.mxu0 0
    %2169 = vmatmul.mubr.bf16.gmra.mrb[0].mxu0 %v2083
    %v2170 = vpop.f32.mrb[0].mxu0
    %v2171 = vadd.f32 0.0, %v2170
    %v2172 = vpop.f32.mrb[0].mxu0
    %v2173 = vpop.f32.mrb[0].mxu0
    %v2174 = vpop.f32.mrb[0].mxu0
    %2175 = vdwg.mxu0
    %v2176 = vpack.c.bf16 %v2130, %v2130
    %v2177 = vpack.c.bf16 %v2132, %v2132
    %v2178 = vpack.c.bf16 %v2171, %v2171
    %v2179 = vlaneseq
    %v2180 = vshrl.u32 %v2179, 7
    %v2181 = vsub.s32 0, %v2180
    %v2182 = vrot.slane %v33, %v2181
    %v2187 = vunpack.c.l.b16 %v1665
    %v2188 = vunpack.c.h.b16 %v1665
    %v2189 = vunpack.c.l.b16 %v1666
    %v2190 = vunpack.c.l.b16 %v1667
    %v2191 = vunpack.c.h.b16 %v1667
    %v2192 = vunpack.c.l.b16 %v1668
    %v2193 = vpack.c.b16 %v2190, %v2187
    %v2194 = vpack.c.b16 %v2191, %v2188
    %v2195 = vpack.c.b16 %v2192, %v2189
    %vm2198 = vcmask 932864
    %v2200 = vsel %vm2198, %v2178, 0
    %v2203 = vsel %vm2198, %v2195, 0
    %2205 = vmatprep.subr.bf16.mxu0 %v2194
    %2206 = vmatpush1.bf16.xpose.msra.mxu0 %v2193
    %2207 = vmatprep.subr.bf16.mxu0 0
    %2208 = vmatpush1.bf16.xpose.msra.mxu0 0
    %2209 = vmatprep.subr.bf16.mxu0 0
    %2210 = vmatpush1.bf16.xpose.msra.mxu0 0
    %2211 = vmatprep.subr.bf16.mxu0 0
    %2212 = vmatpush1.bf16.xpose.msra.mxu0 0
    %2213 = vmatprep.subr.bf16.mxu0 0
    %2214 = vmatpush1.bf16.xpose.msra.mxu0 0
    %2215 = vmatprep.subr.bf16.mxu0 0
    %2216 = vmatpush1.bf16.xpose.msra.mxu0 0
    %2217 = vmatprep.subr.bf16.mxu0 0
    %2218 = vmatpush1.bf16.xpose.msra.mxu0 0
    %2219 = vmatprep.subr.bf16.mxu0 0
    %2220 = vmatpush1.bf16.xpose.msra.mxu0 0
    %2221 = vmatprep.subr.bf16.mxu0 0
    %2222 = vmatpush1.bf16.xpose.msra.mxu0 0
    %2223 = vmatprep.subr.bf16.mxu0 0
    %2224 = vmatpush1.bf16.xpose.msra.mxu0 0
    %2225 = vmatprep.subr.bf16.mxu0 0
    %2226 = vmatpush1.bf16.xpose.msra.mxu0 0
    %2227 = vmatprep.subr.bf16.mxu0 0
    %2228 = vmatpush1.bf16.xpose.msra.mxu0 0
    %2229 = vmatprep.subr.bf16.mxu0 0
    %2230 = vmatpush1.bf16.xpose.msra.mxu0 0
    %2231 = vmatprep.subr.bf16.mxu0 0
    %2232 = vmatpush1.bf16.xpose.msra.mxu0 0
    %2233 = vmatprep.subr.bf16.mxu0 0
    %2234 = vmatpush1.bf16.xpose.msra.mxu0 0
    %2235 = vmatprep.subr.bf16.mxu0 0
    %2236 = vmatpush1.bf16.xpose.msra.mxu0 0
    %2237 = vmatprep.mubr.bf16.mxu0 %v2177
    %2238 = vmatmul.mubr.bf16.gmra.mrb[0].mxu0 %v2176
    %v2239 = vpop.f32.mrb[0].mxu0
    %v2240 = vadd.f32 %v2182, %v2239
    %v2241 = vpop.f32.mrb[0].mxu0
    %v2242 = vpop.f32.mrb[0].mxu0
    %v2243 = vpop.f32.mrb[0].mxu0
    %2244 = vdwg.mxu0
    %2245 = vmatprep.subr.bf16.mxu0 0
    %2246 = vmatpush1.bf16.xpose.msra.mxu0 %v2203
    %2247 = vmatprep.subr.bf16.mxu0 0
    %2248 = vmatpush1.bf16.xpose.msra.mxu0 0
    %2249 = vmatprep.subr.bf16.mxu0 0
    %2250 = vmatpush1.bf16.xpose.msra.mxu0 0
    %2251 = vmatprep.subr.bf16.mxu0 0
    %2252 = vmatpush1.bf16.xpose.msra.mxu0 0
    %2253 = vmatprep.subr.bf16.mxu0 0
    %2254 = vmatpush1.bf16.xpose.msra.mxu0 0
    %2255 = vmatprep.subr.bf16.mxu0 0
    %2256 = vmatpush1.bf16.xpose.msra.mxu0 0
    %2257 = vmatprep.subr.bf16.mxu0 0
    %2258 = vmatpush1.bf16.xpose.msra.mxu0 0
    %2259 = vmatprep.subr.bf16.mxu0 0
    %2260 = vmatpush1.bf16.xpose.msra.mxu0 0
    %2261 = vmatprep.subr.bf16.mxu0 0
    %2262 = vmatpush1.bf16.xpose.msra.mxu0 0
    %2263 = vmatprep.subr.bf16.mxu0 0
    %2264 = vmatpush1.bf16.xpose.msra.mxu0 0
    %2265 = vmatprep.subr.bf16.mxu0 0
    %2266 = vmatpush1.bf16.xpose.msra.mxu0 0
    %2267 = vmatprep.subr.bf16.mxu0 0
    %2268 = vmatpush1.bf16.xpose.msra.mxu0 0
    %2269 = vmatprep.subr.bf16.mxu0 0
    %2270 = vmatpush1.bf16.xpose.msra.mxu0 0
    %2271 = vmatprep.subr.bf16.mxu0 0
    %2272 = vmatpush1.bf16.xpose.msra.mxu0 0
    %2273 = vmatprep.subr.bf16.mxu0 0
    %2274 = vmatpush1.bf16.xpose.msra.mxu0 0
    %2275 = vmatprep.subr.bf16.mxu0 0
    %2276 = vmatpush1.bf16.xpose.msra.mxu0 0
    %2277 = vmatprep.mubr.bf16.mxu0 0
    %2278 = vmatmul.mubr.bf16.gmra.mrb[0].mxu0 %v2200
    %v2279 = vpop.f32.mrb[0].mxu0
    %v2280 = vadd.f32 %v2240, %v2279
    %v2281 = vpop.f32.mrb[0].mxu0
    %v2282 = vpop.f32.mrb[0].mxu0
    %v2283 = vpop.f32.mrb[0].mxu0
    %2284 = vdwg.mxu0
    %v2285 = vmax.f32 %v2280, 0.0
    %v2286 = vpack.c.bf16 %v2285, %v2285
    %v2287 = vlaneseq
    %v2288 = vshrl.u32 %v2287, 7
    %v2289 = vsub.s32 0, %v2288
    %v2290 = vrot.slane %v34, %v2289
    %vm2291 = vcmask 80896
    %v2293 = vsel %vm2291, %v2286, 0
    %v2296 = vsel %vm2085, %v24, 0
    %2298 = vmatprep.subr.bf16.mxu0 0
    %2299 = vmatpush1.bf16.msra.mxu0 %v2296
    %2300 = vmatprep.subr.bf16.mxu0 0
    %2301 = vmatpush1.bf16.msra.mxu0 0
    %2302 = vmatprep.subr.bf16.mxu0 0
    %2303 = vmatpush1.bf16.msra.mxu0 0
    %2304 = vmatprep.subr.bf16.mxu0 0
    %2305 = vmatpush1.bf16.msra.mxu0 0
    %2306 = vmatprep.subr.bf16.mxu0 0
    %2307 = vmatpush1.bf16.msra.mxu0 0
    %2308 = vmatprep.subr.bf16.mxu0 0
    %2309 = vmatpush1.bf16.msra.mxu0 0
    %2310 = vmatprep.subr.bf16.mxu0 0
    %2311 = vmatpush1.bf16.msra.mxu0 0
    %2312 = vmatprep.subr.bf16.mxu0 0
    %2313 = vmatpush1.bf16.msra.mxu0 0
    %2314 = vmatprep.subr.bf16.mxu0 0
    %2315 = vmatpush1.bf16.msra.mxu0 0
    %2316 = vmatprep.subr.bf16.mxu0 0
    %2317 = vmatpush1.bf16.msra.mxu0 0
    %2318 = vmatprep.subr.bf16.mxu0 0
    %2319 = vmatpush1.bf16.msra.mxu0 0
    %2320 = vmatprep.subr.bf16.mxu0 0
    %2321 = vmatpush1.bf16.msra.mxu0 0
    %2322 = vmatprep.subr.bf16.mxu0 0
    %2323 = vmatpush1.bf16.msra.mxu0 0
    %2324 = vmatprep.subr.bf16.mxu0 0
    %2325 = vmatpush1.bf16.msra.mxu0 0
    %2326 = vmatprep.subr.bf16.mxu0 0
    %2327 = vmatpush1.bf16.msra.mxu0 0
    %2328 = vmatprep.subr.bf16.mxu0 0
    %2329 = vmatpush1.bf16.msra.mxu0 0
    %2330 = vmatprep.mubr.bf16.mxu0 0
    %2331 = vmatmul.mubr.bf16.gmra.mrb[0].mxu0 %v2293
    %v2332 = vpop.f32.mrb[0].mxu0
    %v2333 = vadd.f32 %v2290, %v2332
    %v2334 = vpop.f32.mrb[0].mxu0
    %v2335 = vpop.f32.mrb[0].mxu0
    %v2336 = vpop.f32.mrb[0].mxu0
    %2337 = vdwg.mxu0
    %v2338 = vmax.f32 %v2333, 0.0
    %v2339 = vpack.c.bf16 %v2338, %v2338
    %v2340 = vlaneseq
    %v2341 = vshrl.u32 %v2340, 7
    %v2342 = vsub.s32 0, %v2341
    %v2343 = vrot.slane %v35, %v2342
    %v2345 = vsel %vm2291, %v2339, 0
    %v2348 = vsel %vm2085, %v27, 0
    %2350 = vmatprep.subr.bf16.mxu0 0
    %2351 = vmatpush1.bf16.msra.mxu0 %v2348
    %2352 = vmatprep.subr.bf16.mxu0 0
    %2353 = vmatpush1.bf16.msra.mxu0 0
    %2354 = vmatprep.subr.bf16.mxu0 0
    %2355 = vmatpush1.bf16.msra.mxu0 0
    %2356 = vmatprep.subr.bf16.mxu0 0
    %2357 = vmatpush1.bf16.msra.mxu0 0
    %2358 = vmatprep.subr.bf16.mxu0 0
    %2359 = vmatpush1.bf16.msra.mxu0 0
    %2360 = vmatprep.subr.bf16.mxu0 0
    %2361 = vmatpush1.bf16.msra.mxu0 0
    %2362 = vmatprep.subr.bf16.mxu0 0
    %2363 = vmatpush1.bf16.msra.mxu0 0
    %2364 = vmatprep.subr.bf16.mxu0 0
    %2365 = vmatpush1.bf16.msra.mxu0 0
    %2366 = vmatprep.subr.bf16.mxu0 0
    %2367 = vmatpush1.bf16.msra.mxu0 0
    %2368 = vmatprep.subr.bf16.mxu0 0
    %2369 = vmatpush1.bf16.msra.mxu0 0
    %2370 = vmatprep.subr.bf16.mxu0 0
    %2371 = vmatpush1.bf16.msra.mxu0 0
    %2372 = vmatprep.subr.bf16.mxu0 0
    %2373 = vmatpush1.bf16.msra.mxu0 0
    %2374 = vmatprep.subr.bf16.mxu0 0
    %2375 = vmatpush1.bf16.msra.mxu0 0
    %2376 = vmatprep.subr.bf16.mxu0 0
    %2377 = vmatpush1.bf16.msra.mxu0 0
    %2378 = vmatprep.subr.bf16.mxu0 0
    %2379 = vmatpush1.bf16.msra.mxu0 0
    %2380 = vmatprep.subr.bf16.mxu0 0
    %2381 = vmatpush1.bf16.msra.mxu0 0
    %2382 = vmatprep.mubr.bf16.mxu0 0
    %2383 = vmatmul.mubr.bf16.gmra.mrb[0].mxu0 %v2345
    %v2384 = vpop.f32.mrb[0].mxu0
    %v2385 = vadd.f32 %v2343, %v2384
    %v2386 = vpop.f32.mrb[0].mxu0
    %v2387 = vpop.f32.mrb[0].mxu0
    %v2388 = vpop.f32.mrb[0].mxu0
    %2389 = vdwg.mxu0
    %v2390 = vmax.f32 %v2385, 0.0
    %v2391 = vpack.c.bf16 %v2390, %v2390
    %v2392 = vlaneseq
    %v2393 = vshrl.u32 %v2392, 7
    %v2394 = vsub.s32 0, %v2393
    %v2395 = vrot.slane %v36, %v2394
    %v2397 = vsel %vm2291, %v2391, 0
    %v2400 = vsel %vm2085, %v30, 0
    %2402 = vmatprep.subr.bf16.mxu0 0
    %2403 = vmatpush1.bf16.msra.mxu0 %v2400
    %2404 = vmatprep.subr.bf16.mxu0 0
    %2405 = vmatpush1.bf16.msra.mxu0 0
    %2406 = vmatprep.subr.bf16.mxu0 0
    %2407 = vmatpush1.bf16.msra.mxu0 0
    %2408 = vmatprep.subr.bf16.mxu0 0
    %2409 = vmatpush1.bf16.msra.mxu0 0
    %2410 = vmatprep.subr.bf16.mxu0 0
    %2411 = vmatpush1.bf16.msra.mxu0 0
    %2412 = vmatprep.subr.bf16.mxu0 0
    %2413 = vmatpush1.bf16.msra.mxu0 0
    %2414 = vmatprep.subr.bf16.mxu0 0
    %2415 = vmatpush1.bf16.msra.mxu0 0
    %2416 = vmatprep.subr.bf16.mxu0 0
    %2417 = vmatpush1.bf16.msra.mxu0 0
    %2418 = vmatprep.subr.bf16.mxu0 0
    %2419 = vmatpush1.bf16.msra.mxu0 0
    %2420 = vmatprep.subr.bf16.mxu0 0
    %2421 = vmatpush1.bf16.msra.mxu0 0
    %2422 = vmatprep.subr.bf16.mxu0 0
    %2423 = vmatpush1.bf16.msra.mxu0 0
    %2424 = vmatprep.subr.bf16.mxu0 0
    %2425 = vmatpush1.bf16.msra.mxu0 0
    %2426 = vmatprep.subr.bf16.mxu0 0
    %2427 = vmatpush1.bf16.msra.mxu0 0
    %2428 = vmatprep.subr.bf16.mxu0 0
    %2429 = vmatpush1.bf16.msra.mxu0 0
    %2430 = vmatprep.subr.bf16.mxu0 0
    %2431 = vmatpush1.bf16.msra.mxu0 0
    %2432 = vmatprep.subr.bf16.mxu0 0
    %2433 = vmatpush1.bf16.msra.mxu0 0
    %2434 = vmatprep.mubr.bf16.mxu0 0
    %2435 = vmatmul.mubr.bf16.gmra.mrb[0].mxu0 %v2397
    %v2436 = vpop.f32.mrb[0].mxu0
    %v2437 = vadd.f32 %v2395, %v2436
    %v2438 = vpop.f32.mrb[0].mxu0
    %v2439 = vpop.f32.mrb[0].mxu0
    %v2440 = vpop.f32.mrb[0].mxu0
    %2441 = vdwg.mxu0
    %v2442 = vsub.f32 0.0, %v2437
    %v2443 = vmul.f32 %v2442, 1.442695
    %v2444 = vpow.pop %v2443
    %v2445 = vadd.f32 %v2444, 1.0
    %v2446 = vrcp.pop %v2445
    %v2447 = vpack.c.bf16 %v2446, %v2446
    %vm2448 = vcmask 0
    %2449 = vst.msk [vmem:[#allocation4] sm:$0x1] %vm2448, %v2447
    // Predicated region
    $region22: #{tpu_custom_call.1} parent=1 // pred_check
      _
    $region23: #{tpu_custom_call.1} parent=1 // pred_check_branch
      %2451 = sbr.rel (0) target = $region25
    $region24: #{tpu_custom_call.1} parent=1 // pred_region
      %s2453 = ssub.s32 16, 16
      %2454 = vsyncadd [#allocation5], %s2453
      %s2456 = sshll.u32 [#allocation4], 4
      %s2457 = int_to_ptr.vmem [resolvable:$true] %s2456
      %2459 = dma.vmem_to_hbm [thread:$0]  %s2457, 16, %s5, [#allocation5]
    $region25: #{tpu_custom_call.1} parent=1 // pred_fallthru
      _
    // Predicated region
    $region26: #{tpu_custom_call.1} parent=1 // pred_check
      _
    $region27: #{tpu_custom_call.1} parent=1 // pred_check_branch
      %2461 = sbr.rel (0) target = $region29
    $region28: #{tpu_custom_call.1} parent=1 // pred_region
      %2462 = dma.done [#allocation5], 16
    $region29: #{tpu_custom_call.1} parent=1 // pred_fallthru
      _
    %2463 = vsyncpa [#allocation5], 1

</llo_original>
